<compile_context>
chip_gen: v6e
topology: v6e:2x2x1
jax: 0.10.0
libtpu: 0.0.40
codegen_flags: <defaults>
</compile_context>

<pallas_src>
import functools

import numpy as np
import jax
import jax.numpy as jnp
from jax import lax
from jax.experimental import pallas as pl
from jax.experimental.pallas import tpu as pltpu

_LANE = 128          # TPU vreg lane width
_GATHER_COLS = 128   # lane-dense RHS width for the one-hot MXU gather


def _round_up(x, m):
    return ((x + m - 1) // m) * m


def _nms_kernel(coords_ref, csplit_ref, scores_ref, out_ref, *, n, cp,
                max_out, m_pad, iou_thr, score_thr, hoist):
    coords = coords_ref[0]    # (5, n): x1, y1, x2, y2, area (lanes = boxes)
    csplit = csplit_ref[0]    # (n, 128): bf16-exact 3-way splits of corners
    scores = scores_ref[0]    # (cp, n); padded lanes / classes are -inf

    # Hoist sublane broadcasts out of the greedy loop (JAX does not CSE
    # broadcast_in_dim); skip when CP*n would burn too many vregs.
    if hoist:
        def row(r):
            return jnp.broadcast_to(coords[r:r + 1, :], (cp, n))
    else:
        def row(r):
            return coords[r:r + 1, :]
    x1, y1, x2, y2, area = (row(r) for r in range(5))

    lane = lax.broadcasted_iota(jnp.int32, (cp, n), 1)      # (cp, n)
    slot = lax.broadcasted_iota(jnp.int32, (1, m_pad), 1)   # (1, m_pad)
    neg_inf = jnp.float32(-jnp.inf)
    thr = jnp.float32(iou_thr)
    sthr = jnp.float32(score_thr)

    def body(t, carry):
        avail, sel, cnt = carry    # (cp,n) f32, (cp,m_pad) i32, (cp,1) i32

        # per-class max over the lane axis (cp classes in lockstep)
        best_score = jnp.max(avail, axis=1, keepdims=True)           # (cp, 1)
        valid = best_score > neg_inf
        # first-occurrence argmax (matches np.argmax tie-break)
        cand = avail == best_score
        best = jnp.min(jnp.where(cand, lane, n), axis=1, keepdims=True)
        best_oh = lane == best                                        # (cp, n)

        # One-hot gather of the best box corners through the (otherwise idle)
        # MXU; hi+mid+lo re-summation is exact for any internal bf16 passes.
        g = jnp.dot(best_oh.astype(jnp.float32), csplit,
                    preferred_element_type=jnp.float32)               # (cp,128)
        bx1 = (g[:, 0:1] + g[:, 1:2]) + g[:, 2:3]
        by1 = (g[:, 3:4] + g[:, 4:5]) + g[:, 5:6]
        bx2 = (g[:, 6:7] + g[:, 7:8]) + g[:, 8:9]
        by2 = (g[:, 9:10] + g[:, 10:11]) + g[:, 11:12]
        barea = (bx2 - bx1) * (by2 - by1)                             # (cp, 1)

        iw = jnp.maximum(jnp.minimum(bx2, x2) - jnp.maximum(bx1, x1), 0.0)
        ih = jnp.maximum(jnp.minimum(by2, y2) - jnp.maximum(by1, y1), 0.0)
        inter = iw * ih
        union = (barea + area) - inter
        # Divide-free IoU test: inter/union > thr  <=>  inter > thr*union.
        # union == 0 gives 0 > 0 == False, matching the reference's NaN path.
        suppress = jnp.logical_or(inter > thr * union, best_oh)
        avail = jnp.where(jnp.logical_and(valid, suppress), neg_inf, avail)

        cnt = cnt + jnp.logical_and(valid, best_score >= sthr).astype(jnp.int32)
        # lanes 1..max_out of the packed output hold the selected indices
        sel = jnp.where(jnp.logical_and(slot == t + 1, valid), best, sel)
        return avail, sel, cnt

    carry = (scores,
             jnp.full((cp, m_pad), -1, jnp.int32),
             jnp.zeros((cp, 1), jnp.int32))
    unroll = True if max_out <= 32 else 4
    _, sel, cnt = lax.fori_loop(0, max_out, body, carry, unroll=unroll)

    # Lane-dense packed writeback: lane 0 = count, lanes 1..max_out = indices.
    out_ref[0] = jnp.where(slot == 0, cnt, sel)


class NonMaxSuppression:
    """JAX/Pallas analog of onnx2pytorch NonMaxSuppression (no parameters)."""

    def __init__(self, center_point_box=0):
        self.center_point_box = center_point_box

    def __call__(self, boxes, scores, max_output_boxes_per_class=0,
                 iou_threshold=0.0, score_threshold=0.0):
        boxes = jnp.asarray(boxes, jnp.float32)    # (B, N, 4)
        scores = jnp.asarray(scores, jnp.float32)  # (B, C, N)
        B, N, _ = boxes.shape
        C = scores.shape[1]
        max_out = int(max_output_boxes_per_class)
        if max_out <= 0:
            return jnp.zeros((0, 3), jnp.int32)

        n_pad = max(_LANE, _round_up(N, _LANE))
        # Class packing: more classes per grid step for small N (independent
        # XLU chains pipeline + grid overhead amortized); keep >= 2 grid steps
        # so both v7x TensorCores get work.
        cp = 8 if n_pad > 512 else max(8, min(32, _round_up(C, 8)))
        while cp > 8 and B * (_round_up(C, cp) // cp) < 2:
            cp -= 8
        c_pad = _round_up(C, cp)
        m_pad = _round_up(max_out + 1, _LANE)
        hoist = cp * n_pad <= 8 * 512

        # Coordinate normalization + per-box area, hoisted out of the kernel
        # (computed once per batch instead of once per (batch, class)).
        b0, b1, b2, b3 = (boxes[..., k] for k in range(4))   # each (B, N)
        if self.center_point_box == 1:
            x1 = b0 - b2 * 0.5
            y1 = b1 - b3 * 0.5
            x2 = b0 + b2 * 0.5
            y2 = b1 + b3 * 0.5
        else:
            # equivalent to the index-gather swap in the torch module
            x1 = jnp.minimum(b0, b2)
            x2 = jnp.maximum(b0, b2)
            y1 = jnp.minimum(b1, b3)
            y2 = jnp.maximum(b1, b3)
        area = (x2 - x1) * (y2 - y1)
        coords = jnp.stack([x1, y1, x2, y2, area], axis=1)            # (B,5,N)
        coords = jnp.pad(coords, ((0, 0), (0, 0), (0, n_pad - N)))

        # bf16-exact 3-way split of each corner so the in-kernel one-hot MXU
        # gather reconstructs the f32 value exactly, whatever the matmul's
        # internal bf16 decomposition is.
        def split3(c):
            hi = c.astype(jnp.bfloat16).astype(jnp.float32)
            r = c - hi
            mid = r.astype(jnp.bfloat16).astype(jnp.float32)
            return hi, mid, r - mid

        parts = []
        for c in (x1, y1, x2, y2):
            parts.extend(split3(c))
        csplit = jnp.stack(parts, axis=-1)                            # (B,N,12)
        csplit = jnp.pad(csplit, ((0, 0), (0, n_pad - N),
                                  (0, _GATHER_COLS - csplit.shape[-1])))

        # Pad lanes and classes with -inf so they are never selected.
        scores_p = jnp.pad(scores, ((0, 0), (0, c_pad - C), (0, n_pad - N)),
                           constant_values=-jnp.inf)

        kernel = functools.partial(
            _nms_kernel, n=n_pad, cp=cp, max_out=max_out, m_pad=m_pad,
            iou_thr=float(iou_threshold), score_thr=float(score_threshold),
            hoist=hoist)

        out = pl.pallas_call(
            kernel,
            out_shape=jax.ShapeDtypeStruct((B, c_pad, m_pad), jnp.int32),
            grid=(B, c_pad // cp),
            in_specs=[
                pl.BlockSpec((1, 5, n_pad), lambda i, j: (i, 0, 0)),
                pl.BlockSpec((1, n_pad, _GATHER_COLS), lambda i, j: (i, 0, 0)),
                pl.BlockSpec((1, cp, n_pad), lambda i, j: (i, j, 0)),
            ],
            out_specs=pl.BlockSpec((1, cp, m_pad), lambda i, j: (i, j, 0)),
            compiler_params=pltpu.CompilerParams(
                dimension_semantics=("parallel", "parallel")),
        )(coords, csplit, scores_p)

        # TODO(synk): the final concatenation has a data-dependent row count,
        # so this compaction stays on the host; pipelines that can consume the
        # fixed-shape packed (count, indices) slab should use `out` directly
        # and skip this device->host sync.
        out_np = np.asarray(jax.device_get(out))
        cnt_np = out_np[:, :C, 0]                     # (B, C)
        sel_np = out_np[:, :C, 1:max_out + 1]         # (B, C, max_out)
        keep = np.arange(max_out)[None, None, :] < cnt_np[:, :, None]
        b_idx, c_idx, p_idx = np.nonzero(keep)   # row-major: batch->class->pos
        rows = np.stack([b_idx, c_idx, sel_np[b_idx, c_idx, p_idx]], axis=1)
        return jnp.asarray(rows.astype(np.int32).reshape(-1, 3))


def _reference(boxes, scores, max_out, iou_thr, score_thr, center_point_box=0):
    """Pure NumPy float32 reference mirroring the torch module."""
    boxes = np.asarray(boxes, np.float32)
    scores = np.asarray(scores, np.float32)
    iou_thr = np.float32(iou_thr)
    score_thr = np.float32(score_thr)
    B, N, _ = boxes.shape
    C = scores.shape[1]
    rows = []
    for i in range(B):
        b = boxes[i]
        if center_point_box == 1:
            cx, cy, w, h = b[:, 0], b[:, 1], b[:, 2], b[:, 3]
            x1, y1 = cx - w / 2, cy - h / 2
            x2, y2 = cx + w / 2, cy + h / 2
        else:
            x1 = np.minimum(b[:, 0], b[:, 2]); x2 = np.maximum(b[:, 0], b[:, 2])
            y1 = np.minimum(b[:, 1], b[:, 3]); y2 = np.maximum(b[:, 1], b[:, 3])
        area = (x2 - x1) * (y2 - y1)
        for j in range(C):
            s = scores[i, j]
            supp = np.zeros(N, bool)
            sel = []
            for _ in range(max_out):
                avail = np.where(supp, -np.inf, s).astype(np.float32)
                best = int(np.argmax(avail))
                if not np.isfinite(avail[best]):
                    break
                sel.append(best)
                iw = np.maximum(np.minimum(x2[best], x2) - np.maximum(x1[best], x1), 0)
                ih = np.maximum(np.minimum(y2[best], y2) - np.maximum(y1[best], y1), 0)
                inter = iw * ih
                iou = inter / (area[best] + area - inter)
                supp |= iou > iou_thr
                supp[best] = True
            sel_arr = np.asarray(sel, dtype=np.int64)
            cnt = int(np.count_nonzero(s[sel_arr] >= score_thr))
            for k in sel[:cnt]:
                rows.append((i, j, int(k)))
    return np.array(rows, dtype=np.int32).reshape(-1, 3)


if __name__ == "__main__":
    key = jax.random.PRNGKey(0)
    kb, ks = jax.random.split(key)
    B, C, N = 2, 3, 16
    # Random corner coords (some reversed -> exercises the swap/normalize path)
    boxes = jax.random.uniform(kb, (B, N, 4), jnp.float32, 0.0, 10.0)
    scores = jax.random.uniform(ks, (B, C, N), jnp.float32)

    max_out, iou_thr, score_thr = 5, 0.5, 0.4

    nms = NonMaxSuppression(center_point_box=0)
    result = nms(boxes, scores, max_output_boxes_per_class=max_out,
                 iou_threshold=iou_thr, score_threshold=score_thr)
    result = jax.block_until_ready(result)

    ref = _reference(np.asarray(boxes), np.asarray(scores), max_out, iou_thr,
                     score_thr, center_point_box=0)
    assert np.array_equal(np.asarray(result), ref), (result, ref)
    print("KERNEL_OK")
</pallas_src>

<mosaic_0001>
module attributes {stable_mosaic.version = 11 : i64} {
  func.func @_nms_kernel(%arg0: i32, %arg1: i32, %arg2: memref<1x5x128xf32, #tpu.memory_space<vmem>>, %arg3: memref<1x128x128xf32, #tpu.memory_space<vmem>>, %arg4: memref<1x8x128xf32, #tpu.memory_space<vmem>>, %arg5: memref<1x8x128xi32, #tpu.memory_space<vmem>>) attributes {dimension_semantics = [#tpu.dimension_semantics<parallel>, #tpu.dimension_semantics<parallel>], iteration_bounds = array<i64: 2, 1>, scalar_prefetch = 0 : i64, scratch_operands = 0 : i64, tpu.core_type = #tpu.core_type<tc>, window_params = [{transform_indices = @transform_0, window_bounds = array<i64: 1, 5, 128>}, {transform_indices = @transform_1, window_bounds = array<i64: 1, 128, 128>}, {transform_indices = @transform_2, window_bounds = array<i64: 1, 8, 128>}, {transform_indices = @transform_3, window_bounds = array<i64: 1, 8, 128>}]} {
    %c0 = arith.constant 0 : index
    %c0_0 = arith.constant 0 : index
    %c0_1 = arith.constant 0 : index
    %0 = vector.load %arg2[%c0, %c0_0, %c0_1] : memref<1x5x128xf32, #tpu.memory_space<vmem>>, vector<1x5x128xf32>
    %1 = vector.shape_cast %0 : vector<1x5x128xf32> to vector<5x128xf32>
    %c0_2 = arith.constant 0 : index
    %c0_3 = arith.constant 0 : index
    %c0_4 = arith.constant 0 : index
    %2 = vector.load %arg3[%c0_2, %c0_3, %c0_4] : memref<1x128x128xf32, #tpu.memory_space<vmem>>, vector<1x128x128xf32>
    %3 = vector.shape_cast %2 : vector<1x128x128xf32> to vector<128x128xf32>
    %c0_5 = arith.constant 0 : index
    %c0_6 = arith.constant 0 : index
    %c0_7 = arith.constant 0 : index
    %4 = vector.load %arg4[%c0_5, %c0_6, %c0_7] : memref<1x8x128xf32, #tpu.memory_space<vmem>>, vector<1x8x128xf32>
    %5 = vector.shape_cast %4 : vector<1x8x128xf32> to vector<8x128xf32>
    %6 = vector.extract_strided_slice %1 {offsets = [0, 0], sizes = [1, 128], strides = [1, 1]} : vector<5x128xf32> to vector<1x128xf32>
    %7 = vector.shape_cast %6 : vector<1x128xf32> to vector<1x128xf32>
    %8 = vector.broadcast %7 : vector<1x128xf32> to vector<8x128xf32>
    %9 = vector.extract_strided_slice %1 {offsets = [1, 0], sizes = [1, 128], strides = [1, 1]} : vector<5x128xf32> to vector<1x128xf32>
    %10 = vector.shape_cast %9 : vector<1x128xf32> to vector<1x128xf32>
    %11 = vector.broadcast %10 : vector<1x128xf32> to vector<8x128xf32>
    %12 = vector.extract_strided_slice %1 {offsets = [2, 0], sizes = [1, 128], strides = [1, 1]} : vector<5x128xf32> to vector<1x128xf32>
    %13 = vector.shape_cast %12 : vector<1x128xf32> to vector<1x128xf32>
    %14 = vector.broadcast %13 : vector<1x128xf32> to vector<8x128xf32>
    %15 = vector.extract_strided_slice %1 {offsets = [3, 0], sizes = [1, 128], strides = [1, 1]} : vector<5x128xf32> to vector<1x128xf32>
    %16 = vector.shape_cast %15 : vector<1x128xf32> to vector<1x128xf32>
    %17 = vector.broadcast %16 : vector<1x128xf32> to vector<8x128xf32>
    %18 = vector.extract_strided_slice %1 {offsets = [4, 0], sizes = [1, 128], strides = [1, 1]} : vector<5x128xf32> to vector<1x128xf32>
    %19 = vector.shape_cast %18 : vector<1x128xf32> to vector<1x128xf32>
    %20 = vector.broadcast %19 : vector<1x128xf32> to vector<8x128xf32>
    %21 = tpu.iota {dimensions = array<i32: 1>} : vector<8x128xi32>
    %22 = tpu.iota {dimensions = array<i32: 1>} : vector<1x128xi32>
    %c-1_i32 = arith.constant -1 : i32
    %23 = vector.broadcast %c-1_i32 : i32 to vector<8x128xi32>
    %c0_i32 = arith.constant 0 : i32
    %24 = vector.broadcast %c0_i32 : i32 to vector<8x1xi32>
    %cst = arith.constant 0xFF800000 : f32
    %cst_8 = arith.constant 5.000000e-01 : f32
    %cst_9 = arith.constant 4.000000e-01 : f32
    %c0_i32_10 = arith.constant 0 : i32
    %cst_11 = arith.constant dense<0xFF800000> : vector<8xf32>
    %25 = vector.multi_reduction <maximumf>, %5, %cst_11 [1] : vector<8x128xf32> to vector<8xf32>
    %26 = vector.shape_cast %25 : vector<8xf32> to vector<8x1xf32>
    %27 = vector.broadcast %cst : f32 to vector<8x1xf32>
    %28 = arith.cmpf ogt, %26, %27 : vector<8x1xf32>
    %29 = vector.broadcast %26 : vector<8x1xf32> to vector<8x128xf32>
    %30 = arith.cmpf oeq, %5, %29 : vector<8x128xf32>
    %c128_i32 = arith.constant 128 : i32
    %31 = vector.broadcast %c128_i32 : i32 to vector<8x128xi32>
    %32 = arith.select %30, %21, %31 : vector<8x128xi1>, vector<8x128xi32>
    %cst_12 = arith.constant dense<2147483647> : vector<8xi32>
    %33 = vector.multi_reduction <minsi>, %32, %cst_12 [1] : vector<8x128xi32> to vector<8xi32>
    %34 = vector.shape_cast %33 : vector<8xi32> to vector<8x1xi32>
    %35 = vector.broadcast %34 : vector<8x1xi32> to vector<8x128xi32>
    %36 = arith.cmpi eq, %21, %35 : vector<8x128xi32>
    %37 = arith.extui %36 : vector<8x128xi1> to vector<8x128xi32>
    %38 = arith.sitofp %37 : vector<8x128xi32> to vector<8x128xf32>
    %cst_13 = arith.constant dense<0.000000e+00> : vector<8x128xf32>
    %39 = tpu.matmul %38, %3, %cst_13 {dimension_numbers = #tpu.dot_dimension_numbers<[1], [0], [0], [1], [0, 0, 1, 1], [], []>} : vector<8x128xf32>, vector<128x128xf32>, vector<8x128xf32> -> vector<8x128xf32>
    %40 = vector.extract_strided_slice %39 {offsets = [0, 0], sizes = [8, 1], strides = [1, 1]} : vector<8x128xf32> to vector<8x1xf32>
    %41 = vector.extract_strided_slice %39 {offsets = [0, 1], sizes = [8, 1], strides = [1, 1]} : vector<8x128xf32> to vector<8x1xf32>
    %42 = arith.addf %40, %41 : vector<8x1xf32>
    %43 = vector.extract_strided_slice %39 {offsets = [0, 2], sizes = [8, 1], strides = [1, 1]} : vector<8x128xf32> to vector<8x1xf32>
    %44 = arith.addf %42, %43 : vector<8x1xf32>
    %45 = vector.extract_strided_slice %39 {offsets = [0, 3], sizes = [8, 1], strides = [1, 1]} : vector<8x128xf32> to vector<8x1xf32>
    %46 = vector.extract_strided_slice %39 {offsets = [0, 4], sizes = [8, 1], strides = [1, 1]} : vector<8x128xf32> to vector<8x1xf32>
    %47 = arith.addf %45, %46 : vector<8x1xf32>
    %48 = vector.extract_strided_slice %39 {offsets = [0, 5], sizes = [8, 1], strides = [1, 1]} : vector<8x128xf32> to vector<8x1xf32>
    %49 = arith.addf %47, %48 : vector<8x1xf32>
    %50 = vector.extract_strided_slice %39 {offsets = [0, 6], sizes = [8, 1], strides = [1, 1]} : vector<8x128xf32> to vector<8x1xf32>
    %51 = vector.extract_strided_slice %39 {offsets = [0, 7], sizes = [8, 1], strides = [1, 1]} : vector<8x128xf32> to vector<8x1xf32>
    %52 = arith.addf %50, %51 : vector<8x1xf32>
    %53 = vector.extract_strided_slice %39 {offsets = [0, 8], sizes = [8, 1], strides = [1, 1]} : vector<8x128xf32> to vector<8x1xf32>
    %54 = arith.addf %52, %53 : vector<8x1xf32>
    %55 = vector.extract_strided_slice %39 {offsets = [0, 9], sizes = [8, 1], strides = [1, 1]} : vector<8x128xf32> to vector<8x1xf32>
    %56 = vector.extract_strided_slice %39 {offsets = [0, 10], sizes = [8, 1], strides = [1, 1]} : vector<8x128xf32> to vector<8x1xf32>
    %57 = arith.addf %55, %56 : vector<8x1xf32>
    %58 = vector.extract_strided_slice %39 {offsets = [0, 11], sizes = [8, 1], strides = [1, 1]} : vector<8x128xf32> to vector<8x1xf32>
    %59 = arith.addf %57, %58 : vector<8x1xf32>
    %60 = arith.subf %54, %44 : vector<8x1xf32>
    %61 = arith.subf %59, %49 : vector<8x1xf32>
    %62 = arith.mulf %60, %61 : vector<8x1xf32>
    %63 = vector.broadcast %54 : vector<8x1xf32> to vector<8x128xf32>
    %64 = arith.minimumf %63, %14 : vector<8x128xf32>
    %65 = vector.broadcast %44 : vector<8x1xf32> to vector<8x128xf32>
    %66 = arith.maximumf %65, %8 : vector<8x128xf32>
    %67 = arith.subf %64, %66 : vector<8x128xf32>
    %cst_14 = arith.constant 0.000000e+00 : f32
    %68 = vector.broadcast %cst_14 : f32 to vector<8x128xf32>
    %69 = arith.maximumf %67, %68 : vector<8x128xf32>
    %70 = vector.broadcast %59 : vector<8x1xf32> to vector<8x128xf32>
    %71 = arith.minimumf %70, %17 : vector<8x128xf32>
    %72 = vector.broadcast %49 : vector<8x1xf32> to vector<8x128xf32>
    %73 = arith.maximumf %72, %11 : vector<8x128xf32>
    %74 = arith.subf %71, %73 : vector<8x128xf32>
    %cst_15 = arith.constant 0.000000e+00 : f32
    %75 = vector.broadcast %cst_15 : f32 to vector<8x128xf32>
    %76 = arith.maximumf %74, %75 : vector<8x128xf32>
    %77 = arith.mulf %69, %76 : vector<8x128xf32>
    %78 = vector.broadcast %62 : vector<8x1xf32> to vector<8x128xf32>
    %79 = arith.addf %78, %20 : vector<8x128xf32>
    %80 = arith.subf %79, %77 : vector<8x128xf32>
    %81 = vector.broadcast %cst_8 : f32 to vector<8x128xf32>
    %82 = arith.mulf %81, %80 : vector<8x128xf32>
    %83 = arith.cmpf ogt, %77, %82 : vector<8x128xf32>
    %84 = arith.ori %83, %36 : vector<8x128xi1>
    %85 = vector.broadcast %28 : vector<8x1xi1> to vector<8x128xi1>
    %86 = arith.andi %85, %84 : vector<8x128xi1>
    %87 = vector.broadcast %cst : f32 to vector<8x128xf32>
    %88 = arith.select %86, %87, %5 : vector<8x128xi1>, vector<8x128xf32>
    %89 = vector.broadcast %cst_9 : f32 to vector<8x1xf32>
    %90 = arith.cmpf oge, %26, %89 : vector<8x1xf32>
    %91 = arith.andi %28, %90 : vector<8x1xi1>
    %92 = arith.extui %91 : vector<8x1xi1> to vector<8x1xi32>
    %93 = arith.addi %24, %92 : vector<8x1xi32>
    %c1_i32 = arith.constant 1 : i32
    %94 = arith.addi %c0_i32_10, %c1_i32 : i32
    %95 = vector.broadcast %94 : i32 to vector<1x128xi32>
    %96 = arith.cmpi eq, %22, %95 : vector<1x128xi32>
    %97 = vector.broadcast %96 : vector<1x128xi1> to vector<8x128xi1>
    %98 = vector.broadcast %28 : vector<8x1xi1> to vector<8x128xi1>
    %99 = arith.andi %97, %98 : vector<8x128xi1>
    %100 = vector.shape_cast %34 : vector<8x1xi32> to vector<8x1xi32>
    %101 = vector.broadcast %100 : vector<8x1xi32> to vector<8x128xi32>
    %102 = arith.select %99, %101, %23 : vector<8x128xi1>, vector<8x128xi32>
    %c1_i32_16 = arith.constant 1 : i32
    %cst_17 = arith.constant dense<0xFF800000> : vector<8xf32>
    %103 = vector.multi_reduction <maximumf>, %88, %cst_17 [1] : vector<8x128xf32> to vector<8xf32>
    %104 = vector.shape_cast %103 : vector<8xf32> to vector<8x1xf32>
    %105 = vector.broadcast %cst : f32 to vector<8x1xf32>
    %106 = arith.cmpf ogt, %104, %105 : vector<8x1xf32>
    %107 = vector.broadcast %104 : vector<8x1xf32> to vector<8x128xf32>
    %108 = arith.cmpf oeq, %88, %107 : vector<8x128xf32>
    %c128_i32_18 = arith.constant 128 : i32
    %109 = vector.broadcast %c128_i32_18 : i32 to vector<8x128xi32>
    %110 = arith.select %108, %21, %109 : vector<8x128xi1>, vector<8x128xi32>
    %cst_19 = arith.constant dense<2147483647> : vector<8xi32>
    %111 = vector.multi_reduction <minsi>, %110, %cst_19 [1] : vector<8x128xi32> to vector<8xi32>
    %112 = vector.shape_cast %111 : vector<8xi32> to vector<8x1xi32>
    %113 = vector.broadcast %112 : vector<8x1xi32> to vector<8x128xi32>
    %114 = arith.cmpi eq, %21, %113 : vector<8x128xi32>
    %115 = arith.extui %114 : vector<8x128xi1> to vector<8x128xi32>
    %116 = arith.sitofp %115 : vector<8x128xi32> to vector<8x128xf32>
    %cst_20 = arith.constant dense<0.000000e+00> : vector<8x128xf32>
    %117 = tpu.matmul %116, %3, %cst_20 {dimension_numbers = #tpu.dot_dimension_numbers<[1], [0], [0], [1], [0, 0, 1, 1], [], []>} : vector<8x128xf32>, vector<128x128xf32>, vector<8x128xf32> -> vector<8x128xf32>
    %118 = vector.extract_strided_slice %117 {offsets = [0, 0], sizes = [8, 1], strides = [1, 1]} : vector<8x128xf32> to vector<8x1xf32>
    %119 = vector.extract_strided_slice %117 {offsets = [0, 1], sizes = [8, 1], strides = [1, 1]} : vector<8x128xf32> to vector<8x1xf32>
    %120 = arith.addf %118, %119 : vector<8x1xf32>
    %121 = vector.extract_strided_slice %117 {offsets = [0, 2], sizes = [8, 1], strides = [1, 1]} : vector<8x128xf32> to vector<8x1xf32>
    %122 = arith.addf %120, %121 : vector<8x1xf32>
    %123 = vector.extract_strided_slice %117 {offsets = [0, 3], sizes = [8, 1], strides = [1, 1]} : vector<8x128xf32> to vector<8x1xf32>
    %124 = vector.extract_strided_slice %117 {offsets = [0, 4], sizes = [8, 1], strides = [1, 1]} : vector<8x128xf32> to vector<8x1xf32>
    %125 = arith.addf %123, %124 : vector<8x1xf32>
    %126 = vector.extract_strided_slice %117 {offsets = [0, 5], sizes = [8, 1], strides = [1, 1]} : vector<8x128xf32> to vector<8x1xf32>
    %127 = arith.addf %125, %126 : vector<8x1xf32>
    %128 = vector.extract_strided_slice %117 {offsets = [0, 6], sizes = [8, 1], strides = [1, 1]} : vector<8x128xf32> to vector<8x1xf32>
    %129 = vector.extract_strided_slice %117 {offsets = [0, 7], sizes = [8, 1], strides = [1, 1]} : vector<8x128xf32> to vector<8x1xf32>
    %130 = arith.addf %128, %129 : vector<8x1xf32>
    %131 = vector.extract_strided_slice %117 {offsets = [0, 8], sizes = [8, 1], strides = [1, 1]} : vector<8x128xf32> to vector<8x1xf32>
    %132 = arith.addf %130, %131 : vector<8x1xf32>
    %133 = vector.extract_strided_slice %117 {offsets = [0, 9], sizes = [8, 1], strides = [1, 1]} : vector<8x128xf32> to vector<8x1xf32>
    %134 = vector.extract_strided_slice %117 {offsets = [0, 10], sizes = [8, 1], strides = [1, 1]} : vector<8x128xf32> to vector<8x1xf32>
    %135 = arith.addf %133, %134 : vector<8x1xf32>
    %136 = vector.extract_strided_slice %117 {offsets = [0, 11], sizes = [8, 1], strides = [1, 1]} : vector<8x128xf32> to vector<8x1xf32>
    %137 = arith.addf %135, %136 : vector<8x1xf32>
    %138 = arith.subf %132, %122 : vector<8x1xf32>
    %139 = arith.subf %137, %127 : vector<8x1xf32>
    %140 = arith.mulf %138, %139 : vector<8x1xf32>
    %141 = vector.broadcast %132 : vector<8x1xf32> to vector<8x128xf32>
    %142 = arith.minimumf %141, %14 : vector<8x128xf32>
    %143 = vector.broadcast %122 : vector<8x1xf32> to vector<8x128xf32>
    %144 = arith.maximumf %143, %8 : vector<8x128xf32>
    %145 = arith.subf %142, %144 : vector<8x128xf32>
    %cst_21 = arith.constant 0.000000e+00 : f32
    %146 = vector.broadcast %cst_21 : f32 to vector<8x128xf32>
    %147 = arith.maximumf %145, %146 : vector<8x128xf32>
    %148 = vector.broadcast %137 : vector<8x1xf32> to vector<8x128xf32>
    %149 = arith.minimumf %148, %17 : vector<8x128xf32>
    %150 = vector.broadcast %127 : vector<8x1xf32> to vector<8x128xf32>
    %151 = arith.maximumf %150, %11 : vector<8x128xf32>
    %152 = arith.subf %149, %151 : vector<8x128xf32>
    %cst_22 = arith.constant 0.000000e+00 : f32
    %153 = vector.broadcast %cst_22 : f32 to vector<8x128xf32>
    %154 = arith.maximumf %152, %153 : vector<8x128xf32>
    %155 = arith.mulf %147, %154 : vector<8x128xf32>
    %156 = vector.broadcast %140 : vector<8x1xf32> to vector<8x128xf32>
    %157 = arith.addf %156, %20 : vector<8x128xf32>
    %158 = arith.subf %157, %155 : vector<8x128xf32>
    %159 = vector.broadcast %cst_8 : f32 to vector<8x128xf32>
    %160 = arith.mulf %159, %158 : vector<8x128xf32>
    %161 = arith.cmpf ogt, %155, %160 : vector<8x128xf32>
    %162 = arith.ori %161, %114 : vector<8x128xi1>
    %163 = vector.broadcast %106 : vector<8x1xi1> to vector<8x128xi1>
    %164 = arith.andi %163, %162 : vector<8x128xi1>
    %165 = vector.broadcast %cst : f32 to vector<8x128xf32>
    %166 = arith.select %164, %165, %88 : vector<8x128xi1>, vector<8x128xf32>
    %167 = vector.broadcast %cst_9 : f32 to vector<8x1xf32>
    %168 = arith.cmpf oge, %104, %167 : vector<8x1xf32>
    %169 = arith.andi %106, %168 : vector<8x1xi1>
    %170 = arith.extui %169 : vector<8x1xi1> to vector<8x1xi32>
    %171 = arith.addi %93, %170 : vector<8x1xi32>
    %c1_i32_23 = arith.constant 1 : i32
    %172 = arith.addi %c1_i32_16, %c1_i32_23 : i32
    %173 = vector.broadcast %172 : i32 to vector<1x128xi32>
    %174 = arith.cmpi eq, %22, %173 : vector<1x128xi32>
    %175 = vector.broadcast %174 : vector<1x128xi1> to vector<8x128xi1>
    %176 = vector.broadcast %106 : vector<8x1xi1> to vector<8x128xi1>
    %177 = arith.andi %175, %176 : vector<8x128xi1>
    %178 = vector.shape_cast %112 : vector<8x1xi32> to vector<8x1xi32>
    %179 = vector.broadcast %178 : vector<8x1xi32> to vector<8x128xi32>
    %180 = arith.select %177, %179, %102 : vector<8x128xi1>, vector<8x128xi32>
    %c2_i32 = arith.constant 2 : i32
    %cst_24 = arith.constant dense<0xFF800000> : vector<8xf32>
    %181 = vector.multi_reduction <maximumf>, %166, %cst_24 [1] : vector<8x128xf32> to vector<8xf32>
    %182 = vector.shape_cast %181 : vector<8xf32> to vector<8x1xf32>
    %183 = vector.broadcast %cst : f32 to vector<8x1xf32>
    %184 = arith.cmpf ogt, %182, %183 : vector<8x1xf32>
    %185 = vector.broadcast %182 : vector<8x1xf32> to vector<8x128xf32>
    %186 = arith.cmpf oeq, %166, %185 : vector<8x128xf32>
    %c128_i32_25 = arith.constant 128 : i32
    %187 = vector.broadcast %c128_i32_25 : i32 to vector<8x128xi32>
    %188 = arith.select %186, %21, %187 : vector<8x128xi1>, vector<8x128xi32>
    %cst_26 = arith.constant dense<2147483647> : vector<8xi32>
    %189 = vector.multi_reduction <minsi>, %188, %cst_26 [1] : vector<8x128xi32> to vector<8xi32>
    %190 = vector.shape_cast %189 : vector<8xi32> to vector<8x1xi32>
    %191 = vector.broadcast %190 : vector<8x1xi32> to vector<8x128xi32>
    %192 = arith.cmpi eq, %21, %191 : vector<8x128xi32>
    %193 = arith.extui %192 : vector<8x128xi1> to vector<8x128xi32>
    %194 = arith.sitofp %193 : vector<8x128xi32> to vector<8x128xf32>
    %cst_27 = arith.constant dense<0.000000e+00> : vector<8x128xf32>
    %195 = tpu.matmul %194, %3, %cst_27 {dimension_numbers = #tpu.dot_dimension_numbers<[1], [0], [0], [1], [0, 0, 1, 1], [], []>} : vector<8x128xf32>, vector<128x128xf32>, vector<8x128xf32> -> vector<8x128xf32>
    %196 = vector.extract_strided_slice %195 {offsets = [0, 0], sizes = [8, 1], strides = [1, 1]} : vector<8x128xf32> to vector<8x1xf32>
    %197 = vector.extract_strided_slice %195 {offsets = [0, 1], sizes = [8, 1], strides = [1, 1]} : vector<8x128xf32> to vector<8x1xf32>
    %198 = arith.addf %196, %197 : vector<8x1xf32>
    %199 = vector.extract_strided_slice %195 {offsets = [0, 2], sizes = [8, 1], strides = [1, 1]} : vector<8x128xf32> to vector<8x1xf32>
    %200 = arith.addf %198, %199 : vector<8x1xf32>
    %201 = vector.extract_strided_slice %195 {offsets = [0, 3], sizes = [8, 1], strides = [1, 1]} : vector<8x128xf32> to vector<8x1xf32>
    %202 = vector.extract_strided_slice %195 {offsets = [0, 4], sizes = [8, 1], strides = [1, 1]} : vector<8x128xf32> to vector<8x1xf32>
    %203 = arith.addf %201, %202 : vector<8x1xf32>
    %204 = vector.extract_strided_slice %195 {offsets = [0, 5], sizes = [8, 1], strides = [1, 1]} : vector<8x128xf32> to vector<8x1xf32>
    %205 = arith.addf %203, %204 : vector<8x1xf32>
    %206 = vector.extract_strided_slice %195 {offsets = [0, 6], sizes = [8, 1], strides = [1, 1]} : vector<8x128xf32> to vector<8x1xf32>
    %207 = vector.extract_strided_slice %195 {offsets = [0, 7], sizes = [8, 1], strides = [1, 1]} : vector<8x128xf32> to vector<8x1xf32>
    %208 = arith.addf %206, %207 : vector<8x1xf32>
    %209 = vector.extract_strided_slice %195 {offsets = [0, 8], sizes = [8, 1], strides = [1, 1]} : vector<8x128xf32> to vector<8x1xf32>
    %210 = arith.addf %208, %209 : vector<8x1xf32>
    %211 = vector.extract_strided_slice %195 {offsets = [0, 9], sizes = [8, 1], strides = [1, 1]} : vector<8x128xf32> to vector<8x1xf32>
    %212 = vector.extract_strided_slice %195 {offsets = [0, 10], sizes = [8, 1], strides = [1, 1]} : vector<8x128xf32> to vector<8x1xf32>
    %213 = arith.addf %211, %212 : vector<8x1xf32>
    %214 = vector.extract_strided_slice %195 {offsets = [0, 11], sizes = [8, 1], strides = [1, 1]} : vector<8x128xf32> to vector<8x1xf32>
    %215 = arith.addf %213, %214 : vector<8x1xf32>
    %216 = arith.subf %210, %200 : vector<8x1xf32>
    %217 = arith.subf %215, %205 : vector<8x1xf32>
    %218 = arith.mulf %216, %217 : vector<8x1xf32>
    %219 = vector.broadcast %210 : vector<8x1xf32> to vector<8x128xf32>
    %220 = arith.minimumf %219, %14 : vector<8x128xf32>
    %221 = vector.broadcast %200 : vector<8x1xf32> to vector<8x128xf32>
    %222 = arith.maximumf %221, %8 : vector<8x128xf32>
    %223 = arith.subf %220, %222 : vector<8x128xf32>
    %cst_28 = arith.constant 0.000000e+00 : f32
    %224 = vector.broadcast %cst_28 : f32 to vector<8x128xf32>
    %225 = arith.maximumf %223, %224 : vector<8x128xf32>
    %226 = vector.broadcast %215 : vector<8x1xf32> to vector<8x128xf32>
    %227 = arith.minimumf %226, %17 : vector<8x128xf32>
    %228 = vector.broadcast %205 : vector<8x1xf32> to vector<8x128xf32>
    %229 = arith.maximumf %228, %11 : vector<8x128xf32>
    %230 = arith.subf %227, %229 : vector<8x128xf32>
    %cst_29 = arith.constant 0.000000e+00 : f32
    %231 = vector.broadcast %cst_29 : f32 to vector<8x128xf32>
    %232 = arith.maximumf %230, %231 : vector<8x128xf32>
    %233 = arith.mulf %225, %232 : vector<8x128xf32>
    %234 = vector.broadcast %218 : vector<8x1xf32> to vector<8x128xf32>
    %235 = arith.addf %234, %20 : vector<8x128xf32>
    %236 = arith.subf %235, %233 : vector<8x128xf32>
    %237 = vector.broadcast %cst_8 : f32 to vector<8x128xf32>
    %238 = arith.mulf %237, %236 : vector<8x128xf32>
    %239 = arith.cmpf ogt, %233, %238 : vector<8x128xf32>
    %240 = arith.ori %239, %192 : vector<8x128xi1>
    %241 = vector.broadcast %184 : vector<8x1xi1> to vector<8x128xi1>
    %242 = arith.andi %241, %240 : vector<8x128xi1>
    %243 = vector.broadcast %cst : f32 to vector<8x128xf32>
    %244 = arith.select %242, %243, %166 : vector<8x128xi1>, vector<8x128xf32>
    %245 = vector.broadcast %cst_9 : f32 to vector<8x1xf32>
    %246 = arith.cmpf oge, %182, %245 : vector<8x1xf32>
    %247 = arith.andi %184, %246 : vector<8x1xi1>
    %248 = arith.extui %247 : vector<8x1xi1> to vector<8x1xi32>
    %249 = arith.addi %171, %248 : vector<8x1xi32>
    %c1_i32_30 = arith.constant 1 : i32
    %250 = arith.addi %c2_i32, %c1_i32_30 : i32
    %251 = vector.broadcast %250 : i32 to vector<1x128xi32>
    %252 = arith.cmpi eq, %22, %251 : vector<1x128xi32>
    %253 = vector.broadcast %252 : vector<1x128xi1> to vector<8x128xi1>
    %254 = vector.broadcast %184 : vector<8x1xi1> to vector<8x128xi1>
    %255 = arith.andi %253, %254 : vector<8x128xi1>
    %256 = vector.shape_cast %190 : vector<8x1xi32> to vector<8x1xi32>
    %257 = vector.broadcast %256 : vector<8x1xi32> to vector<8x128xi32>
    %258 = arith.select %255, %257, %180 : vector<8x128xi1>, vector<8x128xi32>
    %c3_i32 = arith.constant 3 : i32
    %cst_31 = arith.constant dense<0xFF800000> : vector<8xf32>
    %259 = vector.multi_reduction <maximumf>, %244, %cst_31 [1] : vector<8x128xf32> to vector<8xf32>
    %260 = vector.shape_cast %259 : vector<8xf32> to vector<8x1xf32>
    %261 = vector.broadcast %cst : f32 to vector<8x1xf32>
    %262 = arith.cmpf ogt, %260, %261 : vector<8x1xf32>
    %263 = vector.broadcast %260 : vector<8x1xf32> to vector<8x128xf32>
    %264 = arith.cmpf oeq, %244, %263 : vector<8x128xf32>
    %c128_i32_32 = arith.constant 128 : i32
    %265 = vector.broadcast %c128_i32_32 : i32 to vector<8x128xi32>
    %266 = arith.select %264, %21, %265 : vector<8x128xi1>, vector<8x128xi32>
    %cst_33 = arith.constant dense<2147483647> : vector<8xi32>
    %267 = vector.multi_reduction <minsi>, %266, %cst_33 [1] : vector<8x128xi32> to vector<8xi32>
    %268 = vector.shape_cast %267 : vector<8xi32> to vector<8x1xi32>
    %269 = vector.broadcast %268 : vector<8x1xi32> to vector<8x128xi32>
    %270 = arith.cmpi eq, %21, %269 : vector<8x128xi32>
    %271 = arith.extui %270 : vector<8x128xi1> to vector<8x128xi32>
    %272 = arith.sitofp %271 : vector<8x128xi32> to vector<8x128xf32>
    %cst_34 = arith.constant dense<0.000000e+00> : vector<8x128xf32>
    %273 = tpu.matmul %272, %3, %cst_34 {dimension_numbers = #tpu.dot_dimension_numbers<[1], [0], [0], [1], [0, 0, 1, 1], [], []>} : vector<8x128xf32>, vector<128x128xf32>, vector<8x128xf32> -> vector<8x128xf32>
    %274 = vector.extract_strided_slice %273 {offsets = [0, 0], sizes = [8, 1], strides = [1, 1]} : vector<8x128xf32> to vector<8x1xf32>
    %275 = vector.extract_strided_slice %273 {offsets = [0, 1], sizes = [8, 1], strides = [1, 1]} : vector<8x128xf32> to vector<8x1xf32>
    %276 = arith.addf %274, %275 : vector<8x1xf32>
    %277 = vector.extract_strided_slice %273 {offsets = [0, 2], sizes = [8, 1], strides = [1, 1]} : vector<8x128xf32> to vector<8x1xf32>
    %278 = arith.addf %276, %277 : vector<8x1xf32>
    %279 = vector.extract_strided_slice %273 {offsets = [0, 3], sizes = [8, 1], strides = [1, 1]} : vector<8x128xf32> to vector<8x1xf32>
    %280 = vector.extract_strided_slice %273 {offsets = [0, 4], sizes = [8, 1], strides = [1, 1]} : vector<8x128xf32> to vector<8x1xf32>
    %281 = arith.addf %279, %280 : vector<8x1xf32>
    %282 = vector.extract_strided_slice %273 {offsets = [0, 5], sizes = [8, 1], strides = [1, 1]} : vector<8x128xf32> to vector<8x1xf32>
    %283 = arith.addf %281, %282 : vector<8x1xf32>
    %284 = vector.extract_strided_slice %273 {offsets = [0, 6], sizes = [8, 1], strides = [1, 1]} : vector<8x128xf32> to vector<8x1xf32>
    %285 = vector.extract_strided_slice %273 {offsets = [0, 7], sizes = [8, 1], strides = [1, 1]} : vector<8x128xf32> to vector<8x1xf32>
    %286 = arith.addf %284, %285 : vector<8x1xf32>
    %287 = vector.extract_strided_slice %273 {offsets = [0, 8], sizes = [8, 1], strides = [1, 1]} : vector<8x128xf32> to vector<8x1xf32>
    %288 = arith.addf %286, %287 : vector<8x1xf32>
    %289 = vector.extract_strided_slice %273 {offsets = [0, 9], sizes = [8, 1], strides = [1, 1]} : vector<8x128xf32> to vector<8x1xf32>
    %290 = vector.extract_strided_slice %273 {offsets = [0, 10], sizes = [8, 1], strides = [1, 1]} : vector<8x128xf32> to vector<8x1xf32>
    %291 = arith.addf %289, %290 : vector<8x1xf32>
    %292 = vector.extract_strided_slice %273 {offsets = [0, 11], sizes = [8, 1], strides = [1, 1]} : vector<8x128xf32> to vector<8x1xf32>
    %293 = arith.addf %291, %292 : vector<8x1xf32>
    %294 = arith.subf %288, %278 : vector<8x1xf32>
    %295 = arith.subf %293, %283 : vector<8x1xf32>
    %296 = arith.mulf %294, %295 : vector<8x1xf32>
    %297 = vector.broadcast %288 : vector<8x1xf32> to vector<8x128xf32>
    %298 = arith.minimumf %297, %14 : vector<8x128xf32>
    %299 = vector.broadcast %278 : vector<8x1xf32> to vector<8x128xf32>
    %300 = arith.maximumf %299, %8 : vector<8x128xf32>
    %301 = arith.subf %298, %300 : vector<8x128xf32>
    %cst_35 = arith.constant 0.000000e+00 : f32
    %302 = vector.broadcast %cst_35 : f32 to vector<8x128xf32>
    %303 = arith.maximumf %301, %302 : vector<8x128xf32>
    %304 = vector.broadcast %293 : vector<8x1xf32> to vector<8x128xf32>
    %305 = arith.minimumf %304, %17 : vector<8x128xf32>
    %306 = vector.broadcast %283 : vector<8x1xf32> to vector<8x128xf32>
    %307 = arith.maximumf %306, %11 : vector<8x128xf32>
    %308 = arith.subf %305, %307 : vector<8x128xf32>
    %cst_36 = arith.constant 0.000000e+00 : f32
    %309 = vector.broadcast %cst_36 : f32 to vector<8x128xf32>
    %310 = arith.maximumf %308, %309 : vector<8x128xf32>
    %311 = arith.mulf %303, %310 : vector<8x128xf32>
    %312 = vector.broadcast %296 : vector<8x1xf32> to vector<8x128xf32>
    %313 = arith.addf %312, %20 : vector<8x128xf32>
    %314 = arith.subf %313, %311 : vector<8x128xf32>
    %315 = vector.broadcast %cst_8 : f32 to vector<8x128xf32>
    %316 = arith.mulf %315, %314 : vector<8x128xf32>
    %317 = arith.cmpf ogt, %311, %316 : vector<8x128xf32>
    %318 = arith.ori %317, %270 : vector<8x128xi1>
    %319 = vector.broadcast %262 : vector<8x1xi1> to vector<8x128xi1>
    %320 = arith.andi %319, %318 : vector<8x128xi1>
    %321 = vector.broadcast %cst : f32 to vector<8x128xf32>
    %322 = arith.select %320, %321, %244 : vector<8x128xi1>, vector<8x128xf32>
    %323 = vector.broadcast %cst_9 : f32 to vector<8x1xf32>
    %324 = arith.cmpf oge, %260, %323 : vector<8x1xf32>
    %325 = arith.andi %262, %324 : vector<8x1xi1>
    %326 = arith.extui %325 : vector<8x1xi1> to vector<8x1xi32>
    %327 = arith.addi %249, %326 : vector<8x1xi32>
    %c1_i32_37 = arith.constant 1 : i32
    %328 = arith.addi %c3_i32, %c1_i32_37 : i32
    %329 = vector.broadcast %328 : i32 to vector<1x128xi32>
    %330 = arith.cmpi eq, %22, %329 : vector<1x128xi32>
    %331 = vector.broadcast %330 : vector<1x128xi1> to vector<8x128xi1>
    %332 = vector.broadcast %262 : vector<8x1xi1> to vector<8x128xi1>
    %333 = arith.andi %331, %332 : vector<8x128xi1>
    %334 = vector.shape_cast %268 : vector<8x1xi32> to vector<8x1xi32>
    %335 = vector.broadcast %334 : vector<8x1xi32> to vector<8x128xi32>
    %336 = arith.select %333, %335, %258 : vector<8x128xi1>, vector<8x128xi32>
    %c4_i32 = arith.constant 4 : i32
    %cst_38 = arith.constant dense<0xFF800000> : vector<8xf32>
    %337 = vector.multi_reduction <maximumf>, %322, %cst_38 [1] : vector<8x128xf32> to vector<8xf32>
    %338 = vector.shape_cast %337 : vector<8xf32> to vector<8x1xf32>
    %339 = vector.broadcast %cst : f32 to vector<8x1xf32>
    %340 = arith.cmpf ogt, %338, %339 : vector<8x1xf32>
    %341 = vector.broadcast %338 : vector<8x1xf32> to vector<8x128xf32>
    %342 = arith.cmpf oeq, %322, %341 : vector<8x128xf32>
    %c128_i32_39 = arith.constant 128 : i32
    %343 = vector.broadcast %c128_i32_39 : i32 to vector<8x128xi32>
    %344 = arith.select %342, %21, %343 : vector<8x128xi1>, vector<8x128xi32>
    %cst_40 = arith.constant dense<2147483647> : vector<8xi32>
    %345 = vector.multi_reduction <minsi>, %344, %cst_40 [1] : vector<8x128xi32> to vector<8xi32>
    %346 = vector.shape_cast %345 : vector<8xi32> to vector<8x1xi32>
    %347 = vector.broadcast %346 : vector<8x1xi32> to vector<8x128xi32>
    %348 = arith.cmpi eq, %21, %347 : vector<8x128xi32>
    %349 = arith.extui %348 : vector<8x128xi1> to vector<8x128xi32>
    %350 = arith.sitofp %349 : vector<8x128xi32> to vector<8x128xf32>
    %cst_41 = arith.constant dense<0.000000e+00> : vector<8x128xf32>
    %351 = tpu.matmul %350, %3, %cst_41 {dimension_numbers = #tpu.dot_dimension_numbers<[1], [0], [0], [1], [0, 0, 1, 1], [], []>} : vector<8x128xf32>, vector<128x128xf32>, vector<8x128xf32> -> vector<8x128xf32>
    %352 = vector.extract_strided_slice %351 {offsets = [0, 0], sizes = [8, 1], strides = [1, 1]} : vector<8x128xf32> to vector<8x1xf32>
    %353 = vector.extract_strided_slice %351 {offsets = [0, 1], sizes = [8, 1], strides = [1, 1]} : vector<8x128xf32> to vector<8x1xf32>
    %354 = arith.addf %352, %353 : vector<8x1xf32>
    %355 = vector.extract_strided_slice %351 {offsets = [0, 2], sizes = [8, 1], strides = [1, 1]} : vector<8x128xf32> to vector<8x1xf32>
    %356 = arith.addf %354, %355 : vector<8x1xf32>
    %357 = vector.extract_strided_slice %351 {offsets = [0, 3], sizes = [8, 1], strides = [1, 1]} : vector<8x128xf32> to vector<8x1xf32>
    %358 = vector.extract_strided_slice %351 {offsets = [0, 4], sizes = [8, 1], strides = [1, 1]} : vector<8x128xf32> to vector<8x1xf32>
    %359 = arith.addf %357, %358 : vector<8x1xf32>
    %360 = vector.extract_strided_slice %351 {offsets = [0, 5], sizes = [8, 1], strides = [1, 1]} : vector<8x128xf32> to vector<8x1xf32>
    %361 = arith.addf %359, %360 : vector<8x1xf32>
    %362 = vector.extract_strided_slice %351 {offsets = [0, 6], sizes = [8, 1], strides = [1, 1]} : vector<8x128xf32> to vector<8x1xf32>
    %363 = vector.extract_strided_slice %351 {offsets = [0, 7], sizes = [8, 1], strides = [1, 1]} : vector<8x128xf32> to vector<8x1xf32>
    %364 = arith.addf %362, %363 : vector<8x1xf32>
    %365 = vector.extract_strided_slice %351 {offsets = [0, 8], sizes = [8, 1], strides = [1, 1]} : vector<8x128xf32> to vector<8x1xf32>
    %366 = arith.addf %364, %365 : vector<8x1xf32>
    %367 = vector.extract_strided_slice %351 {offsets = [0, 9], sizes = [8, 1], strides = [1, 1]} : vector<8x128xf32> to vector<8x1xf32>
    %368 = vector.extract_strided_slice %351 {offsets = [0, 10], sizes = [8, 1], strides = [1, 1]} : vector<8x128xf32> to vector<8x1xf32>
    %369 = arith.addf %367, %368 : vector<8x1xf32>
    %370 = vector.extract_strided_slice %351 {offsets = [0, 11], sizes = [8, 1], strides = [1, 1]} : vector<8x128xf32> to vector<8x1xf32>
    %371 = arith.addf %369, %370 : vector<8x1xf32>
    %372 = arith.subf %366, %356 : vector<8x1xf32>
    %373 = arith.subf %371, %361 : vector<8x1xf32>
    %374 = arith.mulf %372, %373 : vector<8x1xf32>
    %375 = vector.broadcast %366 : vector<8x1xf32> to vector<8x128xf32>
    %376 = arith.minimumf %375, %14 : vector<8x128xf32>
    %377 = vector.broadcast %356 : vector<8x1xf32> to vector<8x128xf32>
    %378 = arith.maximumf %377, %8 : vector<8x128xf32>
    %379 = arith.subf %376, %378 : vector<8x128xf32>
    %cst_42 = arith.constant 0.000000e+00 : f32
    %380 = vector.broadcast %cst_42 : f32 to vector<8x128xf32>
    %381 = arith.maximumf %379, %380 : vector<8x128xf32>
    %382 = vector.broadcast %371 : vector<8x1xf32> to vector<8x128xf32>
    %383 = arith.minimumf %382, %17 : vector<8x128xf32>
    %384 = vector.broadcast %361 : vector<8x1xf32> to vector<8x128xf32>
    %385 = arith.maximumf %384, %11 : vector<8x128xf32>
    %386 = arith.subf %383, %385 : vector<8x128xf32>
    %cst_43 = arith.constant 0.000000e+00 : f32
    %387 = vector.broadcast %cst_43 : f32 to vector<8x128xf32>
    %388 = arith.maximumf %386, %387 : vector<8x128xf32>
    %389 = arith.mulf %381, %388 : vector<8x128xf32>
    %390 = vector.broadcast %374 : vector<8x1xf32> to vector<8x128xf32>
    %391 = arith.addf %390, %20 : vector<8x128xf32>
    %392 = arith.subf %391, %389 : vector<8x128xf32>
    %393 = vector.broadcast %cst_8 : f32 to vector<8x128xf32>
    %394 = arith.mulf %393, %392 : vector<8x128xf32>
    %395 = arith.cmpf ogt, %389, %394 : vector<8x128xf32>
    %396 = arith.ori %395, %348 : vector<8x128xi1>
    %397 = vector.broadcast %340 : vector<8x1xi1> to vector<8x128xi1>
    %398 = arith.andi %397, %396 : vector<8x128xi1>
    %399 = vector.broadcast %cst : f32 to vector<8x128xf32>
    %400 = arith.select %398, %399, %322 : vector<8x128xi1>, vector<8x128xf32>
    %401 = vector.broadcast %cst_9 : f32 to vector<8x1xf32>
    %402 = arith.cmpf oge, %338, %401 : vector<8x1xf32>
    %403 = arith.andi %340, %402 : vector<8x1xi1>
    %404 = arith.extui %403 : vector<8x1xi1> to vector<8x1xi32>
    %405 = arith.addi %327, %404 : vector<8x1xi32>
    %c1_i32_44 = arith.constant 1 : i32
    %406 = arith.addi %c4_i32, %c1_i32_44 : i32
    %407 = vector.broadcast %406 : i32 to vector<1x128xi32>
    %408 = arith.cmpi eq, %22, %407 : vector<1x128xi32>
    %409 = vector.broadcast %408 : vector<1x128xi1> to vector<8x128xi1>
    %410 = vector.broadcast %340 : vector<8x1xi1> to vector<8x128xi1>
    %411 = arith.andi %409, %410 : vector<8x128xi1>
    %412 = vector.shape_cast %346 : vector<8x1xi32> to vector<8x1xi32>
    %413 = vector.broadcast %412 : vector<8x1xi32> to vector<8x128xi32>
    %414 = arith.select %411, %413, %336 : vector<8x128xi1>, vector<8x128xi32>
    %c5_i32 = arith.constant 5 : i32
    %c0_i32_45 = arith.constant 0 : i32
    %415 = vector.broadcast %c0_i32_45 : i32 to vector<1x128xi32>
    %416 = arith.cmpi eq, %22, %415 : vector<1x128xi32>
    %417 = vector.shape_cast %416 : vector<1x128xi1> to vector<1x128xi1>
    %418 = vector.broadcast %417 : vector<1x128xi1> to vector<8x128xi1>
    %419 = vector.shape_cast %405 : vector<8x1xi32> to vector<8x1xi32>
    %420 = vector.broadcast %419 : vector<8x1xi32> to vector<8x128xi32>
    %421 = arith.select %418, %420, %414 : vector<8x128xi1>, vector<8x128xi32>
    %c0_46 = arith.constant 0 : index
    %c0_47 = arith.constant 0 : index
    %c0_48 = arith.constant 0 : index
    %422 = vector.load %arg5[%c0_46, %c0_47, %c0_48] : memref<1x8x128xi32, #tpu.memory_space<vmem>>, vector<1x8x128xi32>
    %423 = vector.shape_cast %422 : vector<1x8x128xi32> to vector<8x128xi32>
    %424 = vector.shape_cast %421 : vector<8x128xi32> to vector<1x8x128xi32>
    tpu.vector_store %arg5[%c0_46, %c0_47, %c0_48], %424 {strides = array<i32>} : memref<1x8x128xi32, #tpu.memory_space<vmem>>, vector<1x8x128xi32>,
    return
  }
  func.func @transform_0(%arg0: i32, %arg1: i32) -> (i32, i32, i32) {
    %c0_i32 = arith.constant 0 : i32
    %c0_i32_0 = arith.constant 0 : i32
    %c0_i32_1 = arith.constant 0 : i32
    return %arg0, %c0_i32, %c0_i32_0 : i32, i32, i32
  }
  func.func @transform_1(%arg0: i32, %arg1: i32) -> (i32, i32, i32) {
    %c0_i32 = arith.constant 0 : i32
    %c0_i32_0 = arith.constant 0 : i32
    %c0_i32_1 = arith.constant 0 : i32
    return %arg0, %c0_i32, %c0_i32_0 : i32, i32, i32
  }
  func.func @transform_2(%arg0: i32, %arg1: i32) -> (i32, i32, i32) {
    %c0_i32 = arith.constant 0 : i32
    %c0_i32_0 = arith.constant 0 : i32
    return %arg0, %arg1, %c0_i32 : i32, i32, i32
  }
  func.func @transform_3(%arg0: i32, %arg1: i32) -> (i32, i32, i32) {
    %c0_i32 = arith.constant 0 : i32
    %c0_i32_0 = arith.constant 0 : i32
    return %arg0, %arg1, %c0_i32 : i32, i32, i32
  }
}

</mosaic_0001>

<llo_original>
// kernel: tpu_custom_call.1
$region0: #{tpu_custom_call.1}
  #allocation0 [shape = 'u32[]', space=smem, size = 0x4, offset = 0x4, fixed_abs, tag = 'smem constant byte address 0x4 - core index']
  #allocation1 [shape = 'u32[144,128]{1,0:T(1,128)}', space=vmem, size = 0x12000, scoped, tag = 'internal scratch']
  %s0 = inlined_call_operand.vmem [shape: f32[2,5,128], index: 0, kind: input, shape index: {}]
  %s1 = inlined_call_operand.hbm [shape: f32[2,128,128], index: 1, kind: input, shape index: {}]
  %s2 = inlined_call_operand.vmem [shape: f32[2,8,128], index: 2, kind: input, shape index: {}]
  %s3 = inlined_call_operand.hbm [shape: s32[2,8,128], index: 3, kind: output, shape index: {}]
  %s4 = sld [smem:[#allocation0]]
  $region49: #{tpu_custom_call.1} parent=0
    _
  %s6 = ssub.s32 1, %s4
  %s7 = scalar_select 0, %s6, %s4
  $region1: #{tpu_custom_call.1} parent=0
    #allocation2 [shape = 'u8[131072]{0}', space=vmem, size = 0x20000, scoped, tag = 'input window, operand 1']
    #allocation3 [shape = 's32[2]{0}', space=sflag, size = 0x8, scoped, tag = 'scoped memory for tpu_custom_call.1']
    #allocation4 [shape = 's32[2]{0}', space=sflag, size = 0x8, scoped, tag = 'scoped memory for tpu_custom_call.1']
    #allocation5 [shape = 'u8[8192]{0}', space=vmem, size = 0x2000, scoped, tag = 'output window, operand 0']
    %8 = vsyncpa [#allocation3], 0
    %s9 = scalar_lea.sflag [#allocation3], 1
    %10 = vsyncpa %s9, 0
    %11 = vsyncpa [#allocation4], 0
    %s12 = scalar_lea.sflag [#allocation4], 1
    %13 = vsyncpa %s12, 0
    loop: start=0, step=1, limit=4
    $region2: #{tpu_custom_call.1} parent=1 // loop_pre_header
      _
    $region3: #{tpu_custom_call.1} parent=1 // loop_header
      %s15 = sphi 0, %s19
      %p16 = scmp.ge.s32.totalorder %s15, 4
      %s22 = sphi 0, %s34
      %s23 = sphi 0, %s30
      %s24 = sphi 0, %s22
      %s25 = sphi 0, %s23
      %s26 = sphi 0, %s24
      %s27 = sphi 0, %s25
      %s37 = sphi 0, %s39
      %s40 = sphi 0, %s37
      %s41 = sphi 0, %s40
      %s57 = sphi 0, %s41
      %s63 = sphi 0, %s65
      %s66 = sphi 0, %s63
      %s67 = sphi 0, %s66
      %s83 = sphi 0, %s67
      %s91 = sphi 0, %s93
      %s94 = sphi 0, %s91
      %s95 = sphi 0, %s94
      %s111 = sphi 0, %s95
      %s119 = sphi 0, %s121
      %s122 = sphi 0, %s119
      %s123 = sphi 0, %s122
      %s139 = sphi 0, %s123
    $region4: #{tpu_custom_call.1} parent=1 // loop_header_branch
      %18 = sbr.rel (%p16) target = $region8
    $region5: #{tpu_custom_call.1} parent=1 // loop_body
      %s20 = ssub.s32 %s15, 1
      %s21 = ssub.s32 %s15, 2
      %s28 = sadd.s32 1, %s23
      %p29 = scmp.ge.s32.totalorder %s28, 1
      %s30 = scalar_select %p29, 0, %s28
      %s31 = sadd.s32 1, %s22
      %s32 = scalar_select %p29, %s31, %s22
      %p33 = scmp.ge.s32.totalorder %s32, 2
      %s34 = scalar_select %p33, 0, %s32
      %s35 = ssub.s32 %s22, %s34
      %p36 = scmp.eq.s32.totalorder %s35, 0
      %s38 = sadd.s32 %s37, 1
      %s39 = scalar_select %p36, %s37, %s38
      %p42 = pneg %p36
      %p43 = scmp.eq.s32.totalorder %s15, 1
      %p44 = por %p42, %p43
      %p45 = scmp.ne.s32.totalorder %s37, %s40
      %p46 = scmp.eq.s32.totalorder %s15, 0
      %p47 = por %p45, %p46
      %p48 = scmp.ne.s32.totalorder %s37, %s40
      %p49 = scmp.eq.s32.totalorder %s20, 1
      %p50 = por %p48, %p49
      %p51 = scmp.ne.s32.totalorder %s40, %s41
      %p52 = scmp.eq.s32.totalorder %s20, 0
      %p53 = por %p51, %p52
      %p54 = scmp.ne.s32.totalorder %s40, %s41
      %p55 = scmp.eq.s32.totalorder %s21, 1
      %p56 = por %p54, %p55
      %p58 = scmp.ne.s32.totalorder %s41, %s57
      %p59 = scmp.eq.s32.totalorder %s21, 0
      %p60 = por %p58, %p59
      %s61 = ssub.s32 %s22, %s34
      %p62 = scmp.eq.s32.totalorder %s61, 0
      %s64 = sadd.s32 %s63, 1
      %s65 = scalar_select %p62, %s63, %s64
      %p68 = pneg %p62
      %p69 = scmp.eq.s32.totalorder %s15, 1
      %p70 = por %p68, %p69
      %p71 = scmp.ne.s32.totalorder %s63, %s66
      %p72 = scmp.eq.s32.totalorder %s15, 0
      %p73 = por %p71, %p72
      %p74 = scmp.ne.s32.totalorder %s63, %s66
      %p75 = scmp.eq.s32.totalorder %s20, 1
      %p76 = por %p74, %p75
      %p77 = scmp.ne.s32.totalorder %s66, %s67
      %p78 = scmp.eq.s32.totalorder %s20, 0
      %p79 = por %p77, %p78
      %p80 = scmp.ne.s32.totalorder %s66, %s67
      %p81 = scmp.eq.s32.totalorder %s21, 1
      %p82 = por %p80, %p81
      %p84 = scmp.ne.s32.totalorder %s67, %s83
      %p85 = scmp.eq.s32.totalorder %s21, 0
      %p86 = por %p84, %p85
      %s87 = ssub.s32 %s22, %s34
      %s88 = ssub.s32 %s23, %s30
      %s89 = sor.u32 %s87, %s88
      %p90 = scmp.eq.s32.totalorder %s89, 0
      %s92 = sadd.s32 %s91, 1
      %s93 = scalar_select %p90, %s91, %s92
      %p96 = pneg %p90
      %p97 = scmp.eq.s32.totalorder %s15, 1
      %p98 = por %p96, %p97
      %p99 = scmp.ne.s32.totalorder %s91, %s94
      %p100 = scmp.eq.s32.totalorder %s15, 0
      %p101 = por %p99, %p100
      %p102 = scmp.ne.s32.totalorder %s91, %s94
      %p103 = scmp.eq.s32.totalorder %s20, 1
      %p104 = por %p102, %p103
      %p105 = scmp.ne.s32.totalorder %s94, %s95
      %p106 = scmp.eq.s32.totalorder %s20, 0
      %p107 = por %p105, %p106
      %p108 = scmp.ne.s32.totalorder %s94, %s95
      %p109 = scmp.eq.s32.totalorder %s21, 1
      %p110 = por %p108, %p109
      %p112 = scmp.ne.s32.totalorder %s95, %s111
      %p113 = scmp.eq.s32.totalorder %s21, 0
      %p114 = por %p112, %p113
      %s115 = ssub.s32 %s22, %s34
      %s116 = ssub.s32 %s23, %s30
      %s117 = sor.u32 %s115, %s116
      %p118 = scmp.eq.s32.totalorder %s117, 0
      %s120 = sadd.s32 %s119, 1
      %s121 = scalar_select %p118, %s119, %s120
      %p124 = pneg %p118
      %p125 = scmp.eq.s32.totalorder %s15, 1
      %p126 = por %p124, %p125
      %p127 = scmp.ne.s32.totalorder %s119, %s122
      %p128 = scmp.eq.s32.totalorder %s15, 0
      %p129 = por %p127, %p128
      %p130 = scmp.ne.s32.totalorder %s119, %s122
      %p131 = scmp.eq.s32.totalorder %s20, 1
      %p132 = por %p130, %p131
      %p133 = scmp.ne.s32.totalorder %s122, %s123
      %p134 = scmp.eq.s32.totalorder %s20, 0
      %p135 = por %p133, %p134
      %p136 = scmp.ne.s32.totalorder %s122, %s123
      %p137 = scmp.eq.s32.totalorder %s21, 1
      %p138 = por %p136, %p137
      %p140 = scmp.ne.s32.totalorder %s123, %s139
      %p141 = scmp.eq.s32.totalorder %s21, 0
      %p142 = por %p140, %p141
      %p143 = scmp.le.s32.totalorder 1, %s15
      %p144 = scmp.lt.s32.totalorder %s15, 3
      %p145 = pnand %p143, %p144
      %p146 = pneg %p145
      // Predicated region
      $region9: #{tpu_custom_call.1} parent=5 // pred_check
        _
      $region10: #{tpu_custom_call.1} parent=5 // pred_check_branch
        %148 = sbr.rel (%p145) target = $region12
      $region11: #{tpu_custom_call.1} parent=5 // pred_region
        %s149 = ssub.s32 %s15, 1
      $region12: #{tpu_custom_call.1} parent=5 // pred_fallthru
        _
      %p150 = scmp.lt.s32.totalorder %s15, 2
      // Predicated region
      $region13: #{tpu_custom_call.1} parent=5 // pred_check
        %p151 = pneg %p150
      $region14: #{tpu_custom_call.1} parent=5 // pred_check_branch
        %153 = sbr.rel (%p151) target = $region16
      $region15: #{tpu_custom_call.1} parent=5 // pred_region
        // Predicated region
        $region17: #{tpu_custom_call.1} parent=15 // pred_check
          %p154 = pneg %p47
        $region18: #{tpu_custom_call.1} parent=15 // pred_check_branch
          %156 = sbr.rel (%p154) target = $region20
        $region19: #{tpu_custom_call.1} parent=15 // pred_region
          %p157 = scmp.lt.s32.totalorder %s22, 1
          %s158 = scalar_select %p157, %s22, 1
          %s159 = smul.addr %s158, 8
          %s160 = scalar_lea.vmem %s0, %s159
        $region20: #{tpu_custom_call.1} parent=15 // pred_fallthru
          _
        // Predicated region
        $region21: #{tpu_custom_call.1} parent=15 // pred_check
          %p161 = pneg %p73
        $region22: #{tpu_custom_call.1} parent=15 // pred_check_branch
          %163 = sbr.rel (%p161) target = $region24
        $region23: #{tpu_custom_call.1} parent=15 // pred_region
          %s164 = sand.u32 %s63, 1
          %s165 = scalar_lea.sflag [#allocation3], %s164
          %s166 = sand.u32 %s63, 1
          %s167 = smul.addr %s166, 128
          %s168 = scalar_lea.vmem [#allocation2], %s167
          %s170 = ssub.s32 2048, 2048
          %171 = vsyncadd %s165, %s170
          %s172 = smul.addr %s22, 16
          %s173 = smul.addr %s172, 128
          %s174 = scalar_lea.hbm %s1, %s173
          %s175 = sshll.u32 %s168, 4
          %s176 = int_to_ptr.vmem [resolvable:$true] %s175
          %181 = dma.hbm_to_vmem [thread:$0]  %s174, 2048, %s176, %s165, 128, 128, 8
        $region24: #{tpu_custom_call.1} parent=15 // pred_fallthru
          _
        // Predicated region
        $region25: #{tpu_custom_call.1} parent=15 // pred_check
          %p182 = pneg %p101
        $region26: #{tpu_custom_call.1} parent=15 // pred_check_branch
          %184 = sbr.rel (%p182) target = $region28
        $region27: #{tpu_custom_call.1} parent=15 // pred_region
          %p185 = scmp.lt.s32.totalorder %s22, 1
          %s186 = scalar_select %p185, %s22, 1
          %p187 = scmp.lt.s32.totalorder %s23, 0
          %s188 = scalar_select %p187, %s23, 0
          %s189 = sadd.s32 %s188, %s186
          %s190 = smul.addr %s189, 8
          %s191 = scalar_lea.vmem %s2, %s190
        $region28: #{tpu_custom_call.1} parent=15 // pred_fallthru
          _
      $region16: #{tpu_custom_call.1} parent=5 // pred_fallthru
        _
      %p192 = scmp.le.s32.totalorder 1, %s15
      %p193 = scmp.lt.s32.totalorder %s15, 3
      %p194 = pnand %p192, %p193
      %p195 = pneg %p194
      // Predicated region
      $region29: #{tpu_custom_call.1} parent=5 // pred_check
        _
      $region30: #{tpu_custom_call.1} parent=5 // pred_check_branch
        %197 = sbr.rel (%p194) target = $region32
      $region31: #{tpu_custom_call.1} parent=5 // pred_region
        %s198 = ssub.s32 %s15, 1
        %s199 = sand.u32 %s66, 1
        %s200 = scalar_lea.sflag [#allocation3], %s199
        %s201 = sand.u32 %s66, 1
        %s202 = smul.addr %s201, 128
        %s203 = scalar_lea.vmem [#allocation2], %s202
        // Predicated region
        $region33: #{tpu_custom_call.1} parent=31 // pred_check
          %p204 = pneg %p79
        $region34: #{tpu_custom_call.1} parent=31 // pred_check_branch
          %206 = sbr.rel (%p204) target = $region36
        $region35: #{tpu_custom_call.1} parent=31 // pred_region
          %207 = dma.done %s200, 2048
        $region36: #{tpu_custom_call.1} parent=31 // pred_fallthru
          _
        %p208 = scmp.lt.s32.totalorder %s24, 1
        %s209 = scalar_select %p208, %s24, 1
        %s210 = smul.addr %s209, 8
        %s211 = scalar_lea.vmem %s0, %s210
        %p212 = pneg %p53
        %p213 = pneg %p50
        %s214 = sand.u32 %s66, 1
        %s215 = scalar_lea.sflag [#allocation3], %s214
        %s216 = sand.u32 %s66, 1
        %s217 = smul.addr %s216, 128
        %s218 = scalar_lea.vmem [#allocation2], %s217
        %p219 = pneg %p79
        %p220 = pneg %p76
        %p221 = scmp.lt.s32.totalorder %s24, 1
        %s222 = scalar_select %p221, %s24, 1
        %p223 = scmp.lt.s32.totalorder %s25, 0
        %s224 = scalar_select %p223, %s25, 0
        %s225 = sadd.s32 %s224, %s222
        %s226 = smul.addr %s225, 8
        %s227 = scalar_lea.vmem %s2, %s226
        %p228 = pneg %p107
        %p229 = pneg %p104
        %p230 = pneg %p135
        %p231 = pneg %p132
        %s232 = sand.u32 %s122, 1
        %s233 = scalar_lea.sflag [#allocation4], %s232
        %s234 = sand.u32 %s122, 1
        %s235 = smul.addr %s234, 8
        %s236 = scalar_lea.vmem [#allocation5], %s235
        %p237 = scmp.lt.s32.totalorder %s24, 1
        %s238 = scalar_select %p237, %s24, 1
        %s239 = smul.addr %s238, 8
        %s240 = scalar_lea.vmem %s0, %s239
        %p241 = scmp.lt.s32.totalorder %s24, 1
        %s242 = scalar_select %p241, %s24, 1
        %p243 = scmp.lt.s32.totalorder %s25, 0
        %s244 = scalar_select %p243, %s25, 0
        %s245 = sadd.s32 %s244, %s242
        %s246 = smul.addr %s245, 8
        %s247 = scalar_lea.vmem %s2, %s246
        %v248 = vld [vmem:[%s240] sm:$0x1f]
        %v249 = vld [vmem:[%s203] sm:$0xff]
        %v250 = vld [vmem:[%s203 + $0x8] sm:$0xff]
        %v251 = vld [vmem:[%s203 + $0x10] sm:$0xff]
        %v252 = vld [vmem:[%s203 + $0x18] sm:$0xff]
        %v253 = vld [vmem:[%s203 + $0x20] sm:$0xff]
        %v254 = vld [vmem:[%s203 + $0x28] sm:$0xff]
        %v255 = vld [vmem:[%s203 + $0x30] sm:$0xff]
        %v256 = vld [vmem:[%s203 + $0x38] sm:$0xff]
        %v257 = vld [vmem:[%s203 + $0x40] sm:$0xff]
        %v258 = vld [vmem:[%s203 + $0x48] sm:$0xff]
        %v259 = vld [vmem:[%s203 + $0x50] sm:$0xff]
        %v260 = vld [vmem:[%s203 + $0x58] sm:$0xff]
        %v261 = vld [vmem:[%s203 + $0x60] sm:$0xff]
        %v262 = vld [vmem:[%s203 + $0x68] sm:$0xff]
        %v263 = vld [vmem:[%s203 + $0x70] sm:$0xff]
        %v264 = vld [vmem:[%s203 + $0x78] sm:$0xff]
        %v265 = vld [vmem:[%s247] sm:$0xff]
        %v266 = vlaneseq
        %v267 = vshrl.u32 %v266, 7
        %v268 = vsub.s32 0, %v267
        %v269 = vrot.slane %v248, %v268
        %v270 = vlaneseq
        %v271 = vshrl.u32 %v270, 7
        %v272 = vsub.s32 1, %v271
        %v273 = vrot.slane %v248, %v272
        %v274 = vlaneseq
        %v275 = vshrl.u32 %v274, 7
        %v276 = vsub.s32 2, %v275
        %v277 = vrot.slane %v248, %v276
        %v278 = vlaneseq
        %v279 = vshrl.u32 %v278, 7
        %v280 = vsub.s32 3, %v279
        %v281 = vrot.slane %v248, %v280
        %v282 = vlaneseq
        %v283 = vshrl.u32 %v282, 7
        %v284 = vsub.s32 4, %v283
        %v285 = vrot.slane %v248, %v284
        %v286 = vlaneseq
        %v287 = vand.u32 %v286, 127
        %288 = vmax.xlane.f32.xlu0 %v265
        %v289 = vpop.xlane.xlu0 %288
        %vm290 = vcmp.gt.f32.partialorder %v289, -inf
        %vm291 = vcmp.eq.f32.partialorder %v265, %v289
        %v292 = vsel %vm291, %v287, 128
        %v293 = vand.u32 %v292, 65535
        %v294 = vshra.s32 %v292, 16
        %v295 = vcvt.s32.f32 %v293
        %v296 = vcvt.s32.f32 %v294
        %297 = vmin.xlane.f32.xlu0 %v296
        %v298 = vpop.xlane.xlu0 %297
        %vm299 = vcmp.eq.f32.partialorder %v296, %v298
        %v300 = vsel %vm299, %v295, inf
        %301 = vmin.xlane.f32.xlu0 %v300
        %v302 = vpop.xlane.xlu0 %301
        %v303 = vcvt.f32.s32 %v302
        %v304 = vcvt.f32.s32 %v298
        %v305 = vshll.u32 %v304, 16
        %v306 = vadd.s32 %v305, %v303
        %vm307 = vcmp.eq.s32.totalorder %v287, %v306
        %v308 = vsel %vm307, 1, 0
        %v309 = vcvt.s32.f32 %v308
        %310 = vmatprep.subr.mxu0 0.0
        %311 = vmatpush1.msra.mxu0 %v264
        %312 = vmatprep.subr.mxu0 0.0
        %313 = vmatpush1.msra.mxu0 %v263
        %314 = vmatprep.subr.mxu0 0.0
        %315 = vmatpush1.msra.mxu0 %v262
        %316 = vmatprep.subr.mxu0 0.0
        %317 = vmatpush1.msra.mxu0 %v261
        %318 = vmatprep.subr.mxu0 0.0
        %319 = vmatpush1.msra.mxu0 %v260
        %320 = vmatprep.subr.mxu0 0.0
        %321 = vmatpush1.msra.mxu0 %v259
        %322 = vmatprep.subr.mxu0 0.0
        %323 = vmatpush1.msra.mxu0 %v258
        %324 = vmatprep.subr.mxu0 0.0
        %325 = vmatpush1.msra.mxu0 %v257
        %326 = vmatprep.subr.mxu0 0.0
        %327 = vmatpush1.msra.mxu0 %v256
        %328 = vmatprep.subr.mxu0 0.0
        %329 = vmatpush1.msra.mxu0 %v255
        %330 = vmatprep.subr.mxu0 0.0
        %331 = vmatpush1.msra.mxu0 %v254
        %332 = vmatprep.subr.mxu0 0.0
        %333 = vmatpush1.msra.mxu0 %v253
        %334 = vmatprep.subr.mxu0 0.0
        %335 = vmatpush1.msra.mxu0 %v252
        %336 = vmatprep.subr.mxu0 0.0
        %337 = vmatpush1.msra.mxu0 %v251
        %338 = vmatprep.subr.mxu0 0.0
        %339 = vmatpush1.msra.mxu0 %v250
        %340 = vmatprep.subr.mxu0 0.0
        %341 = vmatpush1.msra.mxu0 %v249
        %342 = vmatprep.subr.mxu0 0.0
        %343 = vmatpush2.msra.mxu0 0.0
        %344 = vmatprep.subr.mxu0 0.0
        %345 = vmatpush2.msra.mxu0 0.0
        %346 = vmatprep.subr.mxu0 0.0
        %347 = vmatpush2.msra.mxu0 0.0
        %348 = vmatprep.subr.mxu0 0.0
        %349 = vmatpush2.msra.mxu0 0.0
        %350 = vmatprep.subr.mxu0 0.0
        %351 = vmatpush2.msra.mxu0 0.0
        %352 = vmatprep.subr.mxu0 0.0
        %353 = vmatpush2.msra.mxu0 0.0
        %354 = vmatprep.subr.mxu0 0.0
        %355 = vmatpush2.msra.mxu0 0.0
        %356 = vmatprep.subr.mxu0 0.0
        %357 = vmatpush2.msra.mxu0 0.0
        %358 = vmatprep.subr.mxu0 0.0
        %359 = vmatpush2.msra.mxu0 0.0
        %360 = vmatprep.subr.mxu0 0.0
        %361 = vmatpush2.msra.mxu0 0.0
        %362 = vmatprep.subr.mxu0 0.0
        %363 = vmatpush2.msra.mxu0 0.0
        %364 = vmatprep.subr.mxu0 0.0
        %365 = vmatpush2.msra.mxu0 0.0
        %366 = vmatprep.subr.mxu0 0.0
        %367 = vmatpush2.msra.mxu0 0.0
        %368 = vmatprep.subr.mxu0 0.0
        %369 = vmatpush2.msra.mxu0 0.0
        %370 = vmatprep.subr.mxu0 0.0
        %371 = vmatpush2.msra.mxu0 0.0
        %372 = vmatprep.subr.mxu0 0.0
        %373 = vmatpush2.msra.mxu0 0.0
        %374 = vmatprep.mubr.f32.mxu0 0.0
        %375 = vmatmul.mubr.f32.gmra.mxu0 %v309
        %v376 = vpop.f32.mrf.mxu0
        %v377 = vadd.f32 0.0, %v376
        %v378 = vpop.f32.mrf.mxu0
        %379 = vdwg.mxu0
        %381 = vrot.lane.b32.xlu0 %v377, 127
        %v382 = vpop.permute.xlu0 %381
        %v384 = vadd.f32 %v377, %v382
        %385 = vrot.lane.b32.xlu0 %v377, 126
        %v386 = vpop.permute.xlu0 %385
        %v388 = vadd.f32 %v384, %v386
        %390 = vrot.lane.b32.xlu0 %v388, 6
        %v391 = vpop.permute.xlu0 %390
        %v393 = vsub.f32 %v388, %v391
        %395 = vrot.lane.b32.xlu0 %v393, 125
        %v396 = vpop.permute.xlu0 %395
        %v398 = vmul.f32 %v393, %v396
        %399 = vset.pattern.permute.xlu0 6
        %400 = vperm.xlu0 %399, %v388
        %v401 = vpop.permute.xlu0 %400
        %v403 = vmin.f32 %v401, %v277
        %404 = vset.pattern.permute.xlu0 0
        %405 = vperm.xlu0 %404, %v388
        %v406 = vpop.permute.xlu0 %405
        %v408 = vmax.f32 %v406, %v269
        %v409 = vsub.f32 %v403, %v408
        %v410 = vmax.f32 %v409, 0.0
        %411 = vset.pattern.permute.xlu0 9
        %412 = vperm.xlu0 %411, %v388
        %v413 = vpop.permute.xlu0 %412
        %v415 = vmin.f32 %v413, %v281
        %416 = vset.pattern.permute.xlu0 3
        %417 = vperm.xlu0 %416, %v388
        %v418 = vpop.permute.xlu0 %417
        %v420 = vmax.f32 %v418, %v273
        %v421 = vsub.f32 %v415, %v420
        %v422 = vmax.f32 %v421, 0.0
        %v423 = vmul.f32 %v410, %v422
        %425 = vset.pattern.permute.xlu0 6
        %426 = vperm.xlu0 %425, %v398
        %v427 = vpop.permute.xlu0 %426
        %v429 = vadd.f32 %v427, %v285
        %v430 = vsub.f32 %v429, %v423
        %v431 = vmul.f32 %v430, 0.5
        %vm432 = vcmp.gt.f32.partialorder %v423, %v431
        %vm433 = vmor %vm432, %vm307
        %v434 = vsel %vm290, 1, 0
        %vm435 = vcmp.eq.s32.totalorder %v434, 1
        %vm436 = vmand %vm435, %vm433
        %v437 = vsel %vm436, -inf, %v265
        %vm438 = vcmp.ge.f32.partialorder %v289, 0.4
        %vm439 = vmand %vm290, %vm438
        %v440 = vsel %vm439, 1, 0
        %vm441 = vcmp.eq.s32.totalorder %v287, 1
        %v442 = vsel %vm441, 1, 0
        %vm443 = vcmp.eq.s32.totalorder %v442, 1
        %vm444 = vmand %vm443, %vm435
        %v445 = vsel %vm444, %v306, 4294967295
        %446 = vmax.xlane.f32.xlu0 %v437
        %v447 = vpop.xlane.xlu0 %446
        %vm448 = vcmp.gt.f32.partialorder %v447, -inf
        %vm449 = vcmp.eq.f32.partialorder %v437, %v447
        %v450 = vsel %vm449, %v287, 128
        %v451 = vand.u32 %v450, 65535
        %v452 = vshra.s32 %v450, 16
        %v453 = vcvt.s32.f32 %v451
        %v454 = vcvt.s32.f32 %v452
        %455 = vmin.xlane.f32.xlu0 %v454
        %v456 = vpop.xlane.xlu0 %455
        %vm457 = vcmp.eq.f32.partialorder %v454, %v456
        %v458 = vsel %vm457, %v453, inf
        %459 = vmin.xlane.f32.xlu0 %v458
        %v460 = vpop.xlane.xlu0 %459
        %v461 = vcvt.f32.s32 %v460
        %v462 = vcvt.f32.s32 %v456
        %v463 = vshll.u32 %v462, 16
        %v464 = vadd.s32 %v463, %v461
        %vm465 = vcmp.eq.s32.totalorder %v287, %v464
        %v466 = vsel %vm465, 1, 0
        %v467 = vcvt.s32.f32 %v466
        %468 = vmatprep.subr.mxu0 0.0
        %469 = vmatpush1.msra.mxu0 %v264
        %470 = vmatprep.subr.mxu0 0.0
        %471 = vmatpush1.msra.mxu0 %v263
        %472 = vmatprep.subr.mxu0 0.0
        %473 = vmatpush1.msra.mxu0 %v262
        %474 = vmatprep.subr.mxu0 0.0
        %475 = vmatpush1.msra.mxu0 %v261
        %476 = vmatprep.subr.mxu0 0.0
        %477 = vmatpush1.msra.mxu0 %v260
        %478 = vmatprep.subr.mxu0 0.0
        %479 = vmatpush1.msra.mxu0 %v259
        %480 = vmatprep.subr.mxu0 0.0
        %481 = vmatpush1.msra.mxu0 %v258
        %482 = vmatprep.subr.mxu0 0.0
        %483 = vmatpush1.msra.mxu0 %v257
        %484 = vmatprep.subr.mxu0 0.0
        %485 = vmatpush1.msra.mxu0 %v256
        %486 = vmatprep.subr.mxu0 0.0
        %487 = vmatpush1.msra.mxu0 %v255
        %488 = vmatprep.subr.mxu0 0.0
        %489 = vmatpush1.msra.mxu0 %v254
        %490 = vmatprep.subr.mxu0 0.0
        %491 = vmatpush1.msra.mxu0 %v253
        %492 = vmatprep.subr.mxu0 0.0
        %493 = vmatpush1.msra.mxu0 %v252
        %494 = vmatprep.subr.mxu0 0.0
        %495 = vmatpush1.msra.mxu0 %v251
        %496 = vmatprep.subr.mxu0 0.0
        %497 = vmatpush1.msra.mxu0 %v250
        %498 = vmatprep.subr.mxu0 0.0
        %499 = vmatpush1.msra.mxu0 %v249
        %500 = vmatprep.subr.mxu0 0.0
        %501 = vmatpush2.msra.mxu0 0.0
        %502 = vmatprep.subr.mxu0 0.0
        %503 = vmatpush2.msra.mxu0 0.0
        %504 = vmatprep.subr.mxu0 0.0
        %505 = vmatpush2.msra.mxu0 0.0
        %506 = vmatprep.subr.mxu0 0.0
        %507 = vmatpush2.msra.mxu0 0.0
        %508 = vmatprep.subr.mxu0 0.0
        %509 = vmatpush2.msra.mxu0 0.0
        %510 = vmatprep.subr.mxu0 0.0
        %511 = vmatpush2.msra.mxu0 0.0
        %512 = vmatprep.subr.mxu0 0.0
        %513 = vmatpush2.msra.mxu0 0.0
        %514 = vmatprep.subr.mxu0 0.0
        %515 = vmatpush2.msra.mxu0 0.0
        %516 = vmatprep.subr.mxu0 0.0
        %517 = vmatpush2.msra.mxu0 0.0
        %518 = vmatprep.subr.mxu0 0.0
        %519 = vmatpush2.msra.mxu0 0.0
        %520 = vmatprep.subr.mxu0 0.0
        %521 = vmatpush2.msra.mxu0 0.0
        %522 = vmatprep.subr.mxu0 0.0
        %523 = vmatpush2.msra.mxu0 0.0
        %524 = vmatprep.subr.mxu0 0.0
        %525 = vmatpush2.msra.mxu0 0.0
        %526 = vmatprep.subr.mxu0 0.0
        %527 = vmatpush2.msra.mxu0 0.0
        %528 = vmatprep.subr.mxu0 0.0
        %529 = vmatpush2.msra.mxu0 0.0
        %530 = vmatprep.subr.mxu0 0.0
        %531 = vmatpush2.msra.mxu0 0.0
        %532 = vmatprep.mubr.f32.mxu0 0.0
        %533 = vmatmul.mubr.f32.gmra.mxu0 %v467
        %v534 = vpop.f32.mrf.mxu0
        %v535 = vadd.f32 0.0, %v534
        %v536 = vpop.f32.mrf.mxu0
        %537 = vdwg.mxu0
        %539 = vrot.lane.b32.xlu0 %v535, 127
        %v540 = vpop.permute.xlu0 %539
        %v542 = vadd.f32 %v535, %v540
        %543 = vrot.lane.b32.xlu0 %v535, 126
        %v544 = vpop.permute.xlu0 %543
        %v546 = vadd.f32 %v542, %v544
        %548 = vrot.lane.b32.xlu0 %v546, 6
        %v549 = vpop.permute.xlu0 %548
        %v551 = vsub.f32 %v546, %v549
        %553 = vrot.lane.b32.xlu0 %v551, 125
        %v554 = vpop.permute.xlu0 %553
        %v556 = vmul.f32 %v551, %v554
        %557 = vset.pattern.permute.xlu0 6
        %558 = vperm.xlu0 %557, %v546
        %v559 = vpop.permute.xlu0 %558
        %v561 = vmin.f32 %v559, %v277
        %562 = vset.pattern.permute.xlu0 0
        %563 = vperm.xlu0 %562, %v546
        %v564 = vpop.permute.xlu0 %563
        %v566 = vmax.f32 %v564, %v269
        %v567 = vsub.f32 %v561, %v566
        %v568 = vmax.f32 %v567, 0.0
        %569 = vset.pattern.permute.xlu0 9
        %570 = vperm.xlu0 %569, %v546
        %v571 = vpop.permute.xlu0 %570
        %v573 = vmin.f32 %v571, %v281
        %574 = vset.pattern.permute.xlu0 3
        %575 = vperm.xlu0 %574, %v546
        %v576 = vpop.permute.xlu0 %575
        %v578 = vmax.f32 %v576, %v273
        %v579 = vsub.f32 %v573, %v578
        %v580 = vmax.f32 %v579, 0.0
        %v581 = vmul.f32 %v568, %v580
        %583 = vset.pattern.permute.xlu0 6
        %584 = vperm.xlu0 %583, %v556
        %v585 = vpop.permute.xlu0 %584
        %v587 = vadd.f32 %v585, %v285
        %v588 = vsub.f32 %v587, %v581
        %v589 = vmul.f32 %v588, 0.5
        %vm590 = vcmp.gt.f32.partialorder %v581, %v589
        %vm591 = vmor %vm590, %vm465
        %v592 = vsel %vm448, 1, 0
        %vm593 = vcmp.eq.s32.totalorder %v592, 1
        %vm594 = vmand %vm593, %vm591
        %v595 = vsel %vm594, -inf, %v437
        %vm596 = vcmp.ge.f32.partialorder %v447, 0.4
        %vm597 = vmand %vm448, %vm596
        %v598 = vsel %vm597, 1, 0
        %v599 = vadd.s32 %v440, %v598
        %vm600 = vcmp.eq.s32.totalorder %v287, 2
        %v601 = vsel %vm600, 1, 0
        %vm602 = vcmp.eq.s32.totalorder %v601, 1
        %vm603 = vmand %vm602, %vm593
        %v604 = vsel %vm603, %v464, %v445
        %605 = vmax.xlane.f32.xlu0 %v595
        %v606 = vpop.xlane.xlu0 %605
        %vm607 = vcmp.gt.f32.partialorder %v606, -inf
        %vm608 = vcmp.eq.f32.partialorder %v595, %v606
        %v609 = vsel %vm608, %v287, 128
        %v610 = vand.u32 %v609, 65535
        %v611 = vshra.s32 %v609, 16
        %v612 = vcvt.s32.f32 %v610
        %v613 = vcvt.s32.f32 %v611
        %614 = vmin.xlane.f32.xlu0 %v613
        %v615 = vpop.xlane.xlu0 %614
        %vm616 = vcmp.eq.f32.partialorder %v613, %v615
        %v617 = vsel %vm616, %v612, inf
        %618 = vmin.xlane.f32.xlu0 %v617
        %v619 = vpop.xlane.xlu0 %618
        %v620 = vcvt.f32.s32 %v619
        %v621 = vcvt.f32.s32 %v615
        %v622 = vshll.u32 %v621, 16
        %v623 = vadd.s32 %v622, %v620
        %vm624 = vcmp.eq.s32.totalorder %v287, %v623
        %v625 = vsel %vm624, 1, 0
        %v626 = vcvt.s32.f32 %v625
        %627 = vmatprep.subr.mxu0 0.0
        %628 = vmatpush1.msra.mxu0 %v264
        %629 = vmatprep.subr.mxu0 0.0
        %630 = vmatpush1.msra.mxu0 %v263
        %631 = vmatprep.subr.mxu0 0.0
        %632 = vmatpush1.msra.mxu0 %v262
        %633 = vmatprep.subr.mxu0 0.0
        %634 = vmatpush1.msra.mxu0 %v261
        %635 = vmatprep.subr.mxu0 0.0
        %636 = vmatpush1.msra.mxu0 %v260
        %637 = vmatprep.subr.mxu0 0.0
        %638 = vmatpush1.msra.mxu0 %v259
        %639 = vmatprep.subr.mxu0 0.0
        %640 = vmatpush1.msra.mxu0 %v258
        %641 = vmatprep.subr.mxu0 0.0
        %642 = vmatpush1.msra.mxu0 %v257
        %643 = vmatprep.subr.mxu0 0.0
        %644 = vmatpush1.msra.mxu0 %v256
        %645 = vmatprep.subr.mxu0 0.0
        %646 = vmatpush1.msra.mxu0 %v255
        %647 = vmatprep.subr.mxu0 0.0
        %648 = vmatpush1.msra.mxu0 %v254
        %649 = vmatprep.subr.mxu0 0.0
        %650 = vmatpush1.msra.mxu0 %v253
        %651 = vmatprep.subr.mxu0 0.0
        %652 = vmatpush1.msra.mxu0 %v252
        %653 = vmatprep.subr.mxu0 0.0
        %654 = vmatpush1.msra.mxu0 %v251
        %655 = vmatprep.subr.mxu0 0.0
        %656 = vmatpush1.msra.mxu0 %v250
        %657 = vmatprep.subr.mxu0 0.0
        %658 = vmatpush1.msra.mxu0 %v249
        %659 = vmatprep.subr.mxu0 0.0
        %660 = vmatpush2.msra.mxu0 0.0
        %661 = vmatprep.subr.mxu0 0.0
        %662 = vmatpush2.msra.mxu0 0.0
        %663 = vmatprep.subr.mxu0 0.0
        %664 = vmatpush2.msra.mxu0 0.0
        %665 = vmatprep.subr.mxu0 0.0
        %666 = vmatpush2.msra.mxu0 0.0
        %667 = vmatprep.subr.mxu0 0.0
        %668 = vmatpush2.msra.mxu0 0.0
        %669 = vmatprep.subr.mxu0 0.0
        %670 = vmatpush2.msra.mxu0 0.0
        %671 = vmatprep.subr.mxu0 0.0
        %672 = vmatpush2.msra.mxu0 0.0
        %673 = vmatprep.subr.mxu0 0.0
        %674 = vmatpush2.msra.mxu0 0.0
        %675 = vmatprep.subr.mxu0 0.0
        %676 = vmatpush2.msra.mxu0 0.0
        %677 = vmatprep.subr.mxu0 0.0
        %678 = vmatpush2.msra.mxu0 0.0
        %679 = vmatprep.subr.mxu0 0.0
        %680 = vmatpush2.msra.mxu0 0.0
        %681 = vmatprep.subr.mxu0 0.0
        %682 = vmatpush2.msra.mxu0 0.0
        %683 = vmatprep.subr.mxu0 0.0
        %684 = vmatpush2.msra.mxu0 0.0
        %685 = vmatprep.subr.mxu0 0.0
        %686 = vmatpush2.msra.mxu0 0.0
        %687 = vmatprep.subr.mxu0 0.0
        %688 = vmatpush2.msra.mxu0 0.0
        %689 = vmatprep.subr.mxu0 0.0
        %690 = vmatpush2.msra.mxu0 0.0
        %691 = vmatprep.mubr.f32.mxu0 0.0
        %692 = vmatmul.mubr.f32.gmra.mxu0 %v626
        %v693 = vpop.f32.mrf.mxu0
        %v694 = vadd.f32 0.0, %v693
        %v695 = vpop.f32.mrf.mxu0
        %696 = vdwg.mxu0
        %698 = vrot.lane.b32.xlu0 %v694, 127
        %v699 = vpop.permute.xlu0 %698
        %v701 = vadd.f32 %v694, %v699
        %702 = vrot.lane.b32.xlu0 %v694, 126
        %v703 = vpop.permute.xlu0 %702
        %v705 = vadd.f32 %v701, %v703
        %707 = vrot.lane.b32.xlu0 %v705, 6
        %v708 = vpop.permute.xlu0 %707
        %v710 = vsub.f32 %v705, %v708
        %712 = vrot.lane.b32.xlu0 %v710, 125
        %v713 = vpop.permute.xlu0 %712
        %v715 = vmul.f32 %v710, %v713
        %716 = vset.pattern.permute.xlu0 6
        %717 = vperm.xlu0 %716, %v705
        %v718 = vpop.permute.xlu0 %717
        %v720 = vmin.f32 %v718, %v277
        %721 = vset.pattern.permute.xlu0 0
        %722 = vperm.xlu0 %721, %v705
        %v723 = vpop.permute.xlu0 %722
        %v725 = vmax.f32 %v723, %v269
        %v726 = vsub.f32 %v720, %v725
        %v727 = vmax.f32 %v726, 0.0
        %728 = vset.pattern.permute.xlu0 9
        %729 = vperm.xlu0 %728, %v705
        %v730 = vpop.permute.xlu0 %729
        %v732 = vmin.f32 %v730, %v281
        %733 = vset.pattern.permute.xlu0 3
        %734 = vperm.xlu0 %733, %v705
        %v735 = vpop.permute.xlu0 %734
        %v737 = vmax.f32 %v735, %v273
        %v738 = vsub.f32 %v732, %v737
        %v739 = vmax.f32 %v738, 0.0
        %v740 = vmul.f32 %v727, %v739
        %742 = vset.pattern.permute.xlu0 6
        %743 = vperm.xlu0 %742, %v715
        %v744 = vpop.permute.xlu0 %743
        %v746 = vadd.f32 %v744, %v285
        %v747 = vsub.f32 %v746, %v740
        %v748 = vmul.f32 %v747, 0.5
        %vm749 = vcmp.gt.f32.partialorder %v740, %v748
        %vm750 = vmor %vm749, %vm624
        %v751 = vsel %vm607, 1, 0
        %vm752 = vcmp.eq.s32.totalorder %v751, 1
        %vm753 = vmand %vm752, %vm750
        %v754 = vsel %vm753, -inf, %v595
        %vm755 = vcmp.ge.f32.partialorder %v606, 0.4
        %vm756 = vmand %vm607, %vm755
        %v757 = vsel %vm756, 1, 0
        %v758 = vadd.s32 %v599, %v757
        %vm759 = vcmp.eq.s32.totalorder %v287, 3
        %v760 = vsel %vm759, 1, 0
        %vm761 = vcmp.eq.s32.totalorder %v760, 1
        %vm762 = vmand %vm761, %vm752
        %v763 = vsel %vm762, %v623, %v604
        %764 = vmax.xlane.f32.xlu0 %v754
        %v765 = vpop.xlane.xlu0 %764
        %vm766 = vcmp.gt.f32.partialorder %v765, -inf
        %vm767 = vcmp.eq.f32.partialorder %v754, %v765
        %v768 = vsel %vm767, %v287, 128
        %v769 = vand.u32 %v768, 65535
        %v770 = vshra.s32 %v768, 16
        %v771 = vcvt.s32.f32 %v769
        %v772 = vcvt.s32.f32 %v770
        %773 = vmin.xlane.f32.xlu0 %v772
        %v774 = vpop.xlane.xlu0 %773
        %vm775 = vcmp.eq.f32.partialorder %v772, %v774
        %v776 = vsel %vm775, %v771, inf
        %777 = vmin.xlane.f32.xlu0 %v776
        %v778 = vpop.xlane.xlu0 %777
        %v779 = vcvt.f32.s32 %v778
        %v780 = vcvt.f32.s32 %v774
        %v781 = vshll.u32 %v780, 16
        %v782 = vadd.s32 %v781, %v779
        %vm783 = vcmp.eq.s32.totalorder %v287, %v782
        %v784 = vsel %vm783, 1, 0
        %v785 = vcvt.s32.f32 %v784
        %786 = vmatprep.subr.mxu0 0.0
        %787 = vmatpush1.msra.mxu0 %v264
        %788 = vmatprep.subr.mxu0 0.0
        %789 = vmatpush1.msra.mxu0 %v263
        %790 = vmatprep.subr.mxu0 0.0
        %791 = vmatpush1.msra.mxu0 %v262
        %792 = vmatprep.subr.mxu0 0.0
        %793 = vmatpush1.msra.mxu0 %v261
        %794 = vmatprep.subr.mxu0 0.0
        %795 = vmatpush1.msra.mxu0 %v260
        %796 = vmatprep.subr.mxu0 0.0
        %797 = vmatpush1.msra.mxu0 %v259
        %798 = vmatprep.subr.mxu0 0.0
        %799 = vmatpush1.msra.mxu0 %v258
        %800 = vmatprep.subr.mxu0 0.0
        %801 = vmatpush1.msra.mxu0 %v257
        %802 = vmatprep.subr.mxu0 0.0
        %803 = vmatpush1.msra.mxu0 %v256
        %804 = vmatprep.subr.mxu0 0.0
        %805 = vmatpush1.msra.mxu0 %v255
        %806 = vmatprep.subr.mxu0 0.0
        %807 = vmatpush1.msra.mxu0 %v254
        %808 = vmatprep.subr.mxu0 0.0
        %809 = vmatpush1.msra.mxu0 %v253
        %810 = vmatprep.subr.mxu0 0.0
        %811 = vmatpush1.msra.mxu0 %v252
        %812 = vmatprep.subr.mxu0 0.0
        %813 = vmatpush1.msra.mxu0 %v251
        %814 = vmatprep.subr.mxu0 0.0
        %815 = vmatpush1.msra.mxu0 %v250
        %816 = vmatprep.subr.mxu0 0.0
        %817 = vmatpush1.msra.mxu0 %v249
        %818 = vmatprep.subr.mxu0 0.0
        %819 = vmatpush2.msra.mxu0 0.0
        %820 = vmatprep.subr.mxu0 0.0
        %821 = vmatpush2.msra.mxu0 0.0
        %822 = vmatprep.subr.mxu0 0.0
        %823 = vmatpush2.msra.mxu0 0.0
        %824 = vmatprep.subr.mxu0 0.0
        %825 = vmatpush2.msra.mxu0 0.0
        %826 = vmatprep.subr.mxu0 0.0
        %827 = vmatpush2.msra.mxu0 0.0
        %828 = vmatprep.subr.mxu0 0.0
        %829 = vmatpush2.msra.mxu0 0.0
        %830 = vmatprep.subr.mxu0 0.0
        %831 = vmatpush2.msra.mxu0 0.0
        %832 = vmatprep.subr.mxu0 0.0
        %833 = vmatpush2.msra.mxu0 0.0
        %834 = vmatprep.subr.mxu0 0.0
        %835 = vmatpush2.msra.mxu0 0.0
        %836 = vmatprep.subr.mxu0 0.0
        %837 = vmatpush2.msra.mxu0 0.0
        %838 = vmatprep.subr.mxu0 0.0
        %839 = vmatpush2.msra.mxu0 0.0
        %840 = vmatprep.subr.mxu0 0.0
        %841 = vmatpush2.msra.mxu0 0.0
        %842 = vmatprep.subr.mxu0 0.0
        %843 = vmatpush2.msra.mxu0 0.0
        %844 = vmatprep.subr.mxu0 0.0
        %845 = vmatpush2.msra.mxu0 0.0
        %846 = vmatprep.subr.mxu0 0.0
        %847 = vmatpush2.msra.mxu0 0.0
        %848 = vmatprep.subr.mxu0 0.0
        %849 = vmatpush2.msra.mxu0 0.0
        %850 = vmatprep.mubr.f32.mxu0 0.0
        %851 = vmatmul.mubr.f32.gmra.mxu0 %v785
        %v852 = vpop.f32.mrf.mxu0
        %v853 = vadd.f32 0.0, %v852
        %v854 = vpop.f32.mrf.mxu0
        %855 = vdwg.mxu0
        %857 = vrot.lane.b32.xlu0 %v853, 127
        %v858 = vpop.permute.xlu0 %857
        %v860 = vadd.f32 %v853, %v858
        %861 = vrot.lane.b32.xlu0 %v853, 126
        %v862 = vpop.permute.xlu0 %861
        %v864 = vadd.f32 %v860, %v862
        %866 = vrot.lane.b32.xlu0 %v864, 6
        %v867 = vpop.permute.xlu0 %866
        %v869 = vsub.f32 %v864, %v867
        %871 = vrot.lane.b32.xlu0 %v869, 125
        %v872 = vpop.permute.xlu0 %871
        %v874 = vmul.f32 %v869, %v872
        %875 = vset.pattern.permute.xlu0 6
        %876 = vperm.xlu0 %875, %v864
        %v877 = vpop.permute.xlu0 %876
        %v879 = vmin.f32 %v877, %v277
        %880 = vset.pattern.permute.xlu0 0
        %881 = vperm.xlu0 %880, %v864
        %v882 = vpop.permute.xlu0 %881
        %v884 = vmax.f32 %v882, %v269
        %v885 = vsub.f32 %v879, %v884
        %v886 = vmax.f32 %v885, 0.0
        %887 = vset.pattern.permute.xlu0 9
        %888 = vperm.xlu0 %887, %v864
        %v889 = vpop.permute.xlu0 %888
        %v891 = vmin.f32 %v889, %v281
        %892 = vset.pattern.permute.xlu0 3
        %893 = vperm.xlu0 %892, %v864
        %v894 = vpop.permute.xlu0 %893
        %v896 = vmax.f32 %v894, %v273
        %v897 = vsub.f32 %v891, %v896
        %v898 = vmax.f32 %v897, 0.0
        %v899 = vmul.f32 %v886, %v898
        %901 = vset.pattern.permute.xlu0 6
        %902 = vperm.xlu0 %901, %v874
        %v903 = vpop.permute.xlu0 %902
        %v905 = vadd.f32 %v903, %v285
        %v906 = vsub.f32 %v905, %v899
        %v907 = vmul.f32 %v906, 0.5
        %vm908 = vcmp.gt.f32.partialorder %v899, %v907
        %vm909 = vmor %vm908, %vm783
        %v910 = vsel %vm766, 1, 0
        %vm911 = vcmp.eq.s32.totalorder %v910, 1
        %vm912 = vmand %vm911, %vm909
        %v913 = vsel %vm912, -inf, %v754
        %vm914 = vcmp.ge.f32.partialorder %v765, 0.4
        %vm915 = vmand %vm766, %vm914
        %v916 = vsel %vm915, 1, 0
        %v917 = vadd.s32 %v758, %v916
        %vm918 = vcmp.eq.s32.totalorder %v287, 4
        %v919 = vsel %vm918, 1, 0
        %vm920 = vcmp.eq.s32.totalorder %v919, 1
        %vm921 = vmand %vm920, %vm911
        %v922 = vsel %vm921, %v782, %v763
        %923 = vmax.xlane.f32.xlu0 %v913
        %v924 = vpop.xlane.xlu0 %923
        %vm925 = vcmp.gt.f32.partialorder %v924, -inf
        %vm926 = vcmp.eq.f32.partialorder %v913, %v924
        %v927 = vsel %vm926, %v287, 128
        %v928 = vand.u32 %v927, 65535
        %v929 = vshra.s32 %v927, 16
        %v930 = vcvt.s32.f32 %v928
        %v931 = vcvt.s32.f32 %v929
        %932 = vmin.xlane.f32.xlu0 %v931
        %v933 = vpop.xlane.xlu0 %932
        %vm934 = vcmp.eq.f32.partialorder %v931, %v933
        %v935 = vsel %vm934, %v930, inf
        %936 = vmin.xlane.f32.xlu0 %v935
        %v937 = vpop.xlane.xlu0 %936
        %v938 = vcvt.f32.s32 %v937
        %v939 = vcvt.f32.s32 %v933
        %v940 = vshll.u32 %v939, 16
        %v941 = vadd.s32 %v940, %v938
        %vm942 = vcmp.ge.f32.partialorder %v924, 0.4
        %vm943 = vmand %vm925, %vm942
        %v944 = vsel %vm943, 1, 0
        %v945 = vadd.s32 %v917, %v944
        %vm946 = vcmp.eq.s32.totalorder %v287, 5
        %v947 = vsel %vm946, 1, 0
        %vm948 = vcmp.eq.s32.totalorder %v947, 1
        %v949 = vsel %vm925, 1, 0
        %vm950 = vcmp.eq.s32.totalorder %v949, 1
        %vm951 = vmand %vm948, %vm950
        %v952 = vsel %vm951, %v941, %v922
        %vm953 = vcmp.eq.s32.totalorder %v287, 0
        %v954 = vsel %vm953, 1, 0
        %vm955 = vcmp.eq.s32.totalorder %v954, 1
        %v956 = vsel %vm955, %v945, %v952
        %957 = vst [vmem:[%s236] sm:$0xff] %v956
        %s958 = sand.u32 %s122, 1
        %s959 = scalar_lea.sflag [#allocation4], %s958
        %s960 = sand.u32 %s122, 1
        %s961 = smul.addr %s960, 8
        %s962 = scalar_lea.vmem [#allocation5], %s961
        // Predicated region
        $region37: #{tpu_custom_call.1} parent=31 // pred_check
          %p963 = pneg %p132
        $region38: #{tpu_custom_call.1} parent=31 // pred_check_branch
          %965 = sbr.rel (%p963) target = $region40
        $region39: #{tpu_custom_call.1} parent=31 // pred_region
          %s967 = ssub.s32 128, 128
          %968 = vsyncadd %s959, %s967
          %s969 = sadd.s32 %s25, %s24
          %s970 = smul.addr %s969, 128
          %s971 = scalar_lea.hbm %s3, %s970
          %s973 = sshll.u32 %s962, 4
          %s974 = int_to_ptr.vmem [resolvable:$true] %s973
          %976 = dma.vmem_to_hbm [thread:$0]  %s974, 128, %s971, %s959
        $region40: #{tpu_custom_call.1} parent=31 // pred_fallthru
          _
      $region32: #{tpu_custom_call.1} parent=5 // pred_fallthru
        _
      %p977 = scmp.le.s32.totalorder 2, %s15
      // Predicated region
      $region41: #{tpu_custom_call.1} parent=5 // pred_check
        %p978 = pneg %p977
      $region42: #{tpu_custom_call.1} parent=5 // pred_check_branch
        %980 = sbr.rel (%p978) target = $region44
      $region43: #{tpu_custom_call.1} parent=5 // pred_region
        %s981 = ssub.s32 %s15, 2
        // Predicated region
        $region45: #{tpu_custom_call.1} parent=43 // pred_check
          %p982 = pneg %p138
        $region46: #{tpu_custom_call.1} parent=43 // pred_check_branch
          %984 = sbr.rel (%p982) target = $region48
        $region47: #{tpu_custom_call.1} parent=43 // pred_region
          %s985 = sand.u32 %s123, 1
          %s986 = scalar_lea.sflag [#allocation4], %s985
          %s987 = sand.u32 %s123, 1
          %s988 = smul.addr %s987, 8
          %s989 = scalar_lea.vmem [#allocation5], %s988
          %990 = dma.done %s986, 128
        $region48: #{tpu_custom_call.1} parent=43 // pred_fallthru
          _
      $region44: #{tpu_custom_call.1} parent=5 // pred_fallthru
        _
    $region6: #{tpu_custom_call.1} parent=1 // loop_footer
      %s19 = sadd.s32 1, %s15
    $region7: #{tpu_custom_call.1} parent=1 // loop_footer_branch
      %14 = sbr.rel target = $region3
    $region8: #{tpu_custom_call.1} parent=1 // loop_exit
      _
    %991 = vsyncpa [#allocation3], 1
    %s992 = scalar_lea.sflag [#allocation3], 1
    %993 = vsyncpa %s992, 1
    %994 = vsyncpa [#allocation4], 1
    %s995 = scalar_lea.sflag [#allocation4], 1
    %996 = vsyncpa %s995, 1

</llo_original>
